<compile_context>
chip_gen: v7x
topology: tpu7x:2x2x1
jax: 0.10.0
libtpu: 0.0.40
codegen_flags: <defaults>
</compile_context>

<pallas_src>
import jax
import jax.numpy as jnp
from jax.experimental import pallas as pl
from jax.experimental.pallas import tpu as pltpu

# ----------------------------- model dimensions -----------------------------
B, CIN, H, W = 2, 4, 16, 16        # small synthetic NCHW input
F = CIN * H * W                    # flattened feature dim = 1024
D = 512                            # DIM_LAST_LAYER for TYPE_ARCH == '1default'
NB_CLASSES = 2                     # SoftMax_Net default nb_classes
NC_PAD = 128                       # class dim padded to one full lane group
TB = 16                            # batch tile (bf16 sublane packing = 16 rows/vreg)
B_PAD = ((B + TB - 1) // TB) * TB
NUM_TILES = B_PAD // TB


# ------------------------------- Pallas kernel ------------------------------
def softmax_net_kernel(x_ref, wemb_ref, bemb_ref, wfc_ref, bfc_ref,
                       out_ref, loss_ref):
    # x_ref:    (3, TB, F)      bf16  anchor/positive/negative batch tile
    # wemb_ref: (F, D)          bf16  synthetic embedding weight (VMEM-resident)
    # bemb_ref: (1, D)          f32
    # wfc_ref:  (D, NC_PAD)     f32   final_layer weight; cols 2/3 = -2*c0 / -2*c1
    # bfc_ref:  (1, NC_PAD)     f32   final_layer bias;   cols 2/3 = ||c0||^2 / ||c1||^2
    # out_ref:  (2, TB, NC_PAD) f32   [0]=final_layer(disturb), [1]=final_layer(distance)
    # loss_ref: (1, 1)          f32   SMEM, per-tile partial center-loss sum
    i = pl.program_id(0)

    # --- fused embedding for all three branches: one (3*TB, F) x (F, D) matmul ---
    x = x_ref[...].reshape(3 * TB, F)
    e = jnp.dot(x, wemb_ref[...], preferred_element_type=jnp.float32) + bemb_ref[...]

    # f.normalize(e, p=2, dim=1): e / max(||e||, 1e-12) == e * rsqrt(max(||e||^2, 1e-24))
    sq = jnp.sum(e * e, axis=1, keepdims=True)
    e = e * jax.lax.rsqrt(jnp.maximum(sq, 1e-24))

    anch = e[0:TB]                                                # (TB, D)
    # rows [0:TB] = disturb = |pos - anch| ; rows [TB:2*TB] = distance = |neg - anch|
    xcat = jnp.abs(e[TB:3 * TB] - jnp.concatenate([anch, anch], axis=0))   # (2*TB, D)

    # --- fused classifier + folded CenterLoss terms: one (2*TB, D) x (D, 128) matmul ---
    fc = jnp.dot(xcat, wfc_ref[...], preferred_element_type=jnp.float32) + bfc_ref[...]
    # cols 0..1: real logits; col 2: ||c0||^2 - 2 x.c0; col 3: ||c1||^2 - 2 x.c1

    # CenterLoss distmat entries (disturb -> class 0, distance -> class 1):
    #   d = ||x||^2 + ||c||^2 - 2 x.c   (expanded form, as in torch addmm_)
    xsq = jnp.sum(xcat * xcat, axis=1, keepdims=True)             # (2*TB, 1)
    d_pos = jnp.clip(xsq[:TB] + fc[:TB, 2:3], 1e-12, 1e12)
    d_neg = jnp.clip(xsq[TB:] + fc[TB:, 3:4], 1e-12, 1e12)

    # mask out batch-padding rows; wrapper divides summed partials by the real batch size
    row = jax.lax.broadcasted_iota(jnp.int32, (TB, 1), 0) + i * TB
    valid = (row < B).astype(jnp.float32)
    loss_ref[0, 0] = jnp.sum((d_pos + d_neg) * valid)

    # lane-dense stores; padded cols >= 2 hold center-loss temporaries, sliced off outside
    out_ref[0] = fc[:TB]
    out_ref[1] = fc[TB:]


# --------------------------------- wrapper ----------------------------------
def softmax_net_forward(data_triplet, params):
    """data_triplet: (3, B, C, H, W) = (anchor, positive, negative).
    Returns ((logits_pos, logits_neg), loss_cur) matching SoftMax_Net.forward + self.loss_cur."""
    w_emb, b_emb, centers, w_fc, b_fc = params

    x = data_triplet.reshape(3, B, F).astype(jnp.float32)
    x = jnp.pad(x, ((0, 0), (0, B_PAD - B), (0, 0))).astype(jnp.bfloat16)  # (3, B_PAD, F)

    # Fold the CenterLoss centers into the padded classifier lanes (grid-invariant,
    # done once in the wrapper): weight cols 2/3 <- -2*c0 / -2*c1, bias cols 2/3 <- ||c||^2.
    w_fc_aug = jnp.zeros((D, NC_PAD), jnp.float32)
    w_fc_aug = w_fc_aug.at[:, :NB_CLASSES].set(w_fc)
    w_fc_aug = w_fc_aug.at[:, NB_CLASSES].set(-2.0 * centers[0])
    w_fc_aug = w_fc_aug.at[:, NB_CLASSES + 1].set(-2.0 * centers[1])
    b_fc_aug = jnp.zeros((1, NC_PAD), jnp.float32)
    b_fc_aug = b_fc_aug.at[:, :NB_CLASSES].set(b_fc)
    b_fc_aug = b_fc_aug.at[0, NB_CLASSES].set(jnp.sum(centers[0] * centers[0]))
    b_fc_aug = b_fc_aug.at[0, NB_CLASSES + 1].set(jnp.sum(centers[1] * centers[1]))

    # weights use constant index maps -> loaded once, VMEM-resident across batch tiles
    resident = lambda shape: pl.BlockSpec(shape, lambda i: (0,) * len(shape))

    flops = NUM_TILES * (2 * (3 * TB) * F * D + 2 * (2 * TB) * D * NC_PAD)
    bytes_accessed = (x.size * 2 + F * D * 2 + D * 4 + D * NC_PAD * 4 + NC_PAD * 4
                      + 2 * B_PAD * NC_PAD * 4 + NUM_TILES * 4)

    logits, loss_parts = pl.pallas_call(
        softmax_net_kernel,
        grid=(NUM_TILES,),
        in_specs=[
            pl.BlockSpec((3, TB, F), lambda i: (0, i, 0)),
            resident((F, D)),
            resident((1, D)),
            resident((D, NC_PAD)),
            resident((1, NC_PAD)),
        ],
        out_specs=[
            pl.BlockSpec((2, TB, NC_PAD), lambda i: (0, i, 0)),
            pl.BlockSpec((1, 1), lambda i: (i, 0),
                         memory_space=pltpu.MemorySpace.SMEM),
        ],
        out_shape=[
            jax.ShapeDtypeStruct((2, B_PAD, NC_PAD), jnp.float32),
            jax.ShapeDtypeStruct((NUM_TILES, 1), jnp.float32),
        ],
        compiler_params=pltpu.CompilerParams(
            # NOTE: with B=2 -> NUM_TILES=1 this is a no-op; it only shards the batch-tile
            # axis across v7x's two TensorCores once the real batch gives NUM_TILES >= 2.
            dimension_semantics=("parallel",),
        ),
        cost_estimate=pl.CostEstimate(
            flops=flops,
            transcendentals=NUM_TILES * 3 * TB,
            bytes_accessed=bytes_accessed),
    )(x, w_emb, b_emb, w_fc_aug, b_fc_aug)

    logits_pos = logits[0, :B, :NB_CLASSES]   # final_layer(disturb)
    logits_neg = logits[1, :B, :NB_CLASSES]   # final_layer(distance)
    loss_cur = jnp.sum(loss_parts) / B        # mean(d_neg) + mean(d_pos)
    return (logits_pos, logits_neg), loss_cur


def init_params(key):
    k1, k2, k3, k4, k5 = jax.random.split(key, 5)
    # synthetic embedding net (stand-in for BasicNet(512)); bf16 halves the dominant DMA
    w_emb = (jax.random.normal(k1, (F, D), jnp.float32) * 0.02).astype(jnp.bfloat16)
    b_emb = jax.random.normal(k2, (1, D), jnp.float32) * 0.01
    # CenterLoss centers: nn.Parameter(torch.randn(num_classes, feat_dim))
    centers = jax.random.normal(k3, (NB_CLASSES, D), jnp.float32)
    # final_layer = nn.Linear(512, nb_classes); kept f32 (256 KiB, matches torch nn.Linear)
    w_fc = jax.random.normal(k4, (D, NB_CLASSES), jnp.float32) * 0.04
    b_fc = jax.random.normal(k5, (1, NB_CLASSES), jnp.float32) * 0.01
    return (w_emb, b_emb, centers, w_fc, b_fc)


if __name__ == "__main__":
    key = jax.random.PRNGKey(0)
    kd, kp = jax.random.split(key)

    # triplet of NCHW inputs: (anchor, positive, negative)
    data = jax.random.normal(kd, (3, B, CIN, H, W), jnp.float32)
    params = init_params(kp)

    (logits_pos, logits_neg), loss_cur = softmax_net_forward(data, params)
    jax.block_until_ready(logits_pos)
    jax.block_until_ready(logits_neg)
    jax.block_until_ready(loss_cur)

    assert logits_pos.shape == (B, NB_CLASSES)
    assert logits_neg.shape == (B, NB_CLASSES)
    assert loss_cur.shape == ()
    print("KERNEL_OK")
</pallas_src>

<mosaic_0001>
module attributes {stable_mosaic.version = 11 : i64} {
  func.func @softmax_net_kernel(%arg0: i32, %arg1: memref<3x16x1024xbf16, #tpu.memory_space<vmem>>, %arg2: memref<1024x512xbf16, #tpu.memory_space<vmem>>, %arg3: memref<1x512xf32, #tpu.memory_space<vmem>>, %arg4: memref<512x128xf32, #tpu.memory_space<vmem>>, %arg5: memref<1x128xf32, #tpu.memory_space<vmem>>, %arg6: memref<2x16x128xf32, #tpu.memory_space<vmem>>, %arg7: memref<1x1xf32, #tpu.memory_space<smem>>) attributes {dimension_semantics = [#tpu.dimension_semantics<parallel>], iteration_bounds = array<i64: 1>, scalar_prefetch = 0 : i64, scratch_operands = 0 : i64, tpu.core_type = #tpu.core_type<tc>, window_params = [{transform_indices = @transform_0, window_bounds = array<i64: 3, 16, 1024>}, {pipeline_mode = #tpu.pipeline_mode<synchronous>, transform_indices = @transform_1, window_bounds = array<i64: 1024, 512>}, {pipeline_mode = #tpu.pipeline_mode<synchronous>, transform_indices = @transform_2, window_bounds = array<i64: 1, 512>}, {pipeline_mode = #tpu.pipeline_mode<synchronous>, transform_indices = @transform_3, window_bounds = array<i64: 512, 128>}, {pipeline_mode = #tpu.pipeline_mode<synchronous>, transform_indices = @transform_4, window_bounds = array<i64: 1, 128>}, {transform_indices = @transform_5, window_bounds = array<i64: 2, 16, 128>}, {transform_indices = @transform_6, window_bounds = array<i64: 1, 1>}]} {
    %c0 = arith.constant 0 : index
    %c0_0 = arith.constant 0 : index
    %c0_1 = arith.constant 0 : index
    %0 = vector.load %arg1[%c0, %c0_0, %c0_1] : memref<3x16x1024xbf16, #tpu.memory_space<vmem>>, vector<3x16x1024xbf16>
    %1 = vector.shape_cast %0 : vector<3x16x1024xbf16> to vector<48x1024xbf16>
    %c0_2 = arith.constant 0 : index
    %c0_3 = arith.constant 0 : index
    %2 = vector.load %arg2[%c0_2, %c0_3] : memref<1024x512xbf16, #tpu.memory_space<vmem>>, vector<1024x512xbf16>
    %cst = arith.constant dense<0.000000e+00> : vector<48x512xf32>
    %3 = tpu.matmul %1, %2, %cst {dimension_numbers = #tpu.dot_dimension_numbers<[1], [0], [0], [1], [0, 0, 1, 1], [], []>} : vector<48x1024xbf16>, vector<1024x512xbf16>, vector<48x512xf32> -> vector<48x512xf32>
    %c0_4 = arith.constant 0 : index
    %c0_5 = arith.constant 0 : index
    %4 = vector.load %arg3[%c0_4, %c0_5] : memref<1x512xf32, #tpu.memory_space<vmem>>, vector<1x512xf32>
    %5 = vector.broadcast %4 : vector<1x512xf32> to vector<48x512xf32>
    %6 = arith.addf %3, %5 : vector<48x512xf32>
    %7 = arith.mulf %6, %6 : vector<48x512xf32>
    %cst_6 = arith.constant dense<0.000000e+00> : vector<48xf32>
    %8 = vector.multi_reduction <add>, %7, %cst_6 [1] : vector<48x512xf32> to vector<48xf32>
    %9 = vector.shape_cast %8 : vector<48xf32> to vector<48x1xf32>
    %cst_7 = arith.constant 1.000000e-24 : f32
    %10 = vector.broadcast %cst_7 : f32 to vector<48x1xf32>
    %11 = arith.maximumf %9, %10 : vector<48x1xf32>
    %12 = math.rsqrt %11 : vector<48x1xf32>
    %13 = vector.broadcast %12 : vector<48x1xf32> to vector<48x512xf32>
    %14 = arith.mulf %6, %13 : vector<48x512xf32>
    %15 = vector.extract_strided_slice %14 {offsets = [0, 0], sizes = [16, 512], strides = [1, 1]} : vector<48x512xf32> to vector<16x512xf32>
    %16 = vector.extract_strided_slice %14 {offsets = [16, 0], sizes = [32, 512], strides = [1, 1]} : vector<48x512xf32> to vector<32x512xf32>
    %17 = tpu.concatenate %15, %15 in 0 : vector<16x512xf32>, vector<16x512xf32> -> vector<32x512xf32>
    %18 = arith.subf %16, %17 : vector<32x512xf32>
    %19 = math.absf %18 : vector<32x512xf32>
    %c0_8 = arith.constant 0 : index
    %c0_9 = arith.constant 0 : index
    %20 = vector.load %arg4[%c0_8, %c0_9] : memref<512x128xf32, #tpu.memory_space<vmem>>, vector<512x128xf32>
    %cst_10 = arith.constant dense<0.000000e+00> : vector<32x128xf32>
    %21 = tpu.matmul %19, %20, %cst_10 {dimension_numbers = #tpu.dot_dimension_numbers<[1], [0], [0], [1], [0, 0, 1, 1], [], []>} : vector<32x512xf32>, vector<512x128xf32>, vector<32x128xf32> -> vector<32x128xf32>
    %c0_11 = arith.constant 0 : index
    %c0_12 = arith.constant 0 : index
    %22 = vector.load %arg5[%c0_11, %c0_12] : memref<1x128xf32, #tpu.memory_space<vmem>>, vector<1x128xf32>
    %23 = vector.broadcast %22 : vector<1x128xf32> to vector<32x128xf32>
    %24 = arith.addf %21, %23 : vector<32x128xf32>
    %25 = arith.mulf %19, %19 : vector<32x512xf32>
    %cst_13 = arith.constant dense<0.000000e+00> : vector<32xf32>
    %26 = vector.multi_reduction <add>, %25, %cst_13 [1] : vector<32x512xf32> to vector<32xf32>
    %27 = vector.shape_cast %26 : vector<32xf32> to vector<32x1xf32>
    %28 = vector.extract_strided_slice %27 {offsets = [0, 0], sizes = [16, 1], strides = [1, 1]} : vector<32x1xf32> to vector<16x1xf32>
    %29 = vector.extract_strided_slice %24 {offsets = [0, 2], sizes = [16, 1], strides = [1, 1]} : vector<32x128xf32> to vector<16x1xf32>
    %30 = arith.addf %28, %29 : vector<16x1xf32>
    %cst_14 = arith.constant 9.99999996E-13 : f32
    %cst_15 = arith.constant 9.99999995E+11 : f32
    %31 = vector.broadcast %cst_14 : f32 to vector<16x1xf32>
    %32 = arith.maximumf %31, %30 : vector<16x1xf32>
    %33 = vector.broadcast %cst_15 : f32 to vector<16x1xf32>
    %34 = arith.minimumf %33, %32 : vector<16x1xf32>
    %35 = vector.extract_strided_slice %27 {offsets = [16, 0], sizes = [16, 1], strides = [1, 1]} : vector<32x1xf32> to vector<16x1xf32>
    %36 = vector.extract_strided_slice %24 {offsets = [16, 3], sizes = [16, 1], strides = [1, 1]} : vector<32x128xf32> to vector<16x1xf32>
    %37 = arith.addf %35, %36 : vector<16x1xf32>
    %cst_16 = arith.constant 9.99999996E-13 : f32
    %cst_17 = arith.constant 9.99999995E+11 : f32
    %38 = vector.broadcast %cst_16 : f32 to vector<16x1xf32>
    %39 = arith.maximumf %38, %37 : vector<16x1xf32>
    %40 = vector.broadcast %cst_17 : f32 to vector<16x1xf32>
    %41 = arith.minimumf %40, %39 : vector<16x1xf32>
    %42 = tpu.iota {dimensions = array<i32: 0>} : vector<16x1xi32>
    %c16_i32 = arith.constant 16 : i32
    %43 = arith.muli %arg0, %c16_i32 : i32
    %44 = vector.broadcast %43 : i32 to vector<16x1xi32>
    %45 = arith.addi %42, %44 : vector<16x1xi32>
    %c2_i32 = arith.constant 2 : i32
    %46 = vector.broadcast %c2_i32 : i32 to vector<16x1xi32>
    %47 = arith.cmpi slt, %45, %46 : vector<16x1xi32>
    %48 = arith.extui %47 : vector<16x1xi1> to vector<16x1xi32>
    %49 = arith.sitofp %48 : vector<16x1xi32> to vector<16x1xf32>
    %50 = arith.addf %34, %41 : vector<16x1xf32>
    %51 = arith.mulf %50, %49 : vector<16x1xf32>
    %52 = vector.shape_cast %51 : vector<16x1xf32> to vector<1x16x1xf32>
    %cst_18 = arith.constant dense<0.000000e+00> : vector<1xf32>
    %53 = vector.multi_reduction <add>, %52, %cst_18 [1, 2] : vector<1x16x1xf32> to vector<1xf32>
    %54 = vector.shape_cast %53 : vector<1xf32> to vector<1x1x1xf32>
    %55 = vector.extract %54[0, 0, 0] : f32 from vector<1x1x1xf32>
    %c0_19 = arith.constant 0 : index
    %c0_20 = arith.constant 0 : index
    %56 = memref.load %arg7[%c0_19, %c0_20] : memref<1x1xf32, #tpu.memory_space<smem>>
    memref.store %55, %arg7[%c0_19, %c0_20] : memref<1x1xf32, #tpu.memory_space<smem>>
    %57 = vector.extract_strided_slice %24 {offsets = [0, 0], sizes = [16, 128], strides = [1, 1]} : vector<32x128xf32> to vector<16x128xf32>
    %c0_21 = arith.constant 0 : index
    %c0_22 = arith.constant 0 : index
    %c0_23 = arith.constant 0 : index
    %58 = vector.load %arg6[%c0_21, %c0_22, %c0_23] : memref<2x16x128xf32, #tpu.memory_space<vmem>>, vector<1x16x128xf32>
    %59 = vector.shape_cast %58 : vector<1x16x128xf32> to vector<16x128xf32>
    %60 = vector.shape_cast %57 : vector<16x128xf32> to vector<1x16x128xf32>
    tpu.vector_store %arg6[%c0_21, %c0_22, %c0_23], %60 {strides = array<i32>} : memref<2x16x128xf32, #tpu.memory_space<vmem>>, vector<1x16x128xf32>,
    %61 = vector.extract_strided_slice %24 {offsets = [16, 0], sizes = [16, 128], strides = [1, 1]} : vector<32x128xf32> to vector<16x128xf32>
    %c1 = arith.constant 1 : index
    %c0_24 = arith.constant 0 : index
    %c0_25 = arith.constant 0 : index
    %62 = vector.load %arg6[%c1, %c0_24, %c0_25] : memref<2x16x128xf32, #tpu.memory_space<vmem>>, vector<1x16x128xf32>
    %63 = vector.shape_cast %62 : vector<1x16x128xf32> to vector<16x128xf32>
    %64 = vector.shape_cast %61 : vector<16x128xf32> to vector<1x16x128xf32>
    tpu.vector_store %arg6[%c1, %c0_24, %c0_25], %64 {strides = array<i32>} : memref<2x16x128xf32, #tpu.memory_space<vmem>>, vector<1x16x128xf32>,
    return
  }
  func.func @transform_0(%arg0: i32) -> (i32, i32, i32) {
    %c0_i32 = arith.constant 0 : i32
    %c0_i32_0 = arith.constant 0 : i32
    %c0_i32_1 = arith.constant 0 : i32
    return %c0_i32, %arg0, %c0_i32_0 : i32, i32, i32
  }
  func.func @transform_1(%arg0: i32) -> (i32, i32) {
    %c0_i32 = arith.constant 0 : i32
    %c0_i32_0 = arith.constant 0 : i32
    %c0_i32_1 = arith.constant 0 : i32
    return %c0_i32, %c0_i32_0 : i32, i32
  }
  func.func @transform_2(%arg0: i32) -> (i32, i32) {
    %c0_i32 = arith.constant 0 : i32
    %c0_i32_0 = arith.constant 0 : i32
    %c0_i32_1 = arith.constant 0 : i32
    return %c0_i32, %c0_i32_0 : i32, i32
  }
  func.func @transform_3(%arg0: i32) -> (i32, i32) {
    %c0_i32 = arith.constant 0 : i32
    %c0_i32_0 = arith.constant 0 : i32
    %c0_i32_1 = arith.constant 0 : i32
    return %c0_i32, %c0_i32_0 : i32, i32
  }
  func.func @transform_4(%arg0: i32) -> (i32, i32) {
    %c0_i32 = arith.constant 0 : i32
    %c0_i32_0 = arith.constant 0 : i32
    %c0_i32_1 = arith.constant 0 : i32
    return %c0_i32, %c0_i32_0 : i32, i32
  }
  func.func @transform_5(%arg0: i32) -> (i32, i32, i32) {
    %c0_i32 = arith.constant 0 : i32
    %c0_i32_0 = arith.constant 0 : i32
    %c0_i32_1 = arith.constant 0 : i32
    return %c0_i32, %arg0, %c0_i32_0 : i32, i32, i32
  }
  func.func @transform_6(%arg0: i32) -> (i32, i32) {
    %c0_i32 = arith.constant 0 : i32
    %c0_i32_0 = arith.constant 0 : i32
    return %arg0, %c0_i32 : i32, i32
  }
}

</mosaic_0001>

<llo_original>
// kernel: tpu_custom_call.1
$region0: #{tpu_custom_call.1}
  #allocation0 [shape = 'u32[]', space=smem, size = 0x4, offset = 0x4, fixed_abs, tag = 'smem constant byte address 0x4 - core index']
  #allocation1 [shape = 'u32[144,128]{1,0:T(1,128)}', space=vmem, size = 0x12000, scoped, tag = 'internal scratch']
  %s0 = inlined_call_operand.hbm [shape: bf16[3,16,1024], index: 0, kind: input, shape index: {}]
  %s1 = inlined_call_operand.hbm [shape: bf16[1024,512], index: 1, kind: input, shape index: {}]
  %s2 = inlined_call_operand.vmem [shape: f32[1,512], index: 2, kind: input, shape index: {}]
  %s3 = inlined_call_operand.hbm [shape: f32[512,128], index: 3, kind: input, shape index: {}]
  %s4 = inlined_call_operand.vmem [shape: f32[1,128], index: 4, kind: input, shape index: {}]
  %s5 = inlined_call_operand.hbm [shape: f32[2,16,128], index: 5, kind: output, shape index: {0}]
  %s6 = inlined_call_operand.hbm [shape: f32[1,1], index: 6, kind: output, shape index: {1}]
  %7 = xla_tuple %s5, %s6
  %s8 = sld [smem:[#allocation0]]
  $region50: #{tpu_custom_call.1} parent=0
    _
  %s10 = ssub.s32 1, %s8
  %s11 = scalar_select 0, %s10, %s8
  $region1: #{tpu_custom_call.1} parent=0
    #allocation2 [shape = 'u8[98304]{0}', space=vmem, size = 0x18000, scoped, tag = 'input window, operand 0, single buffered']
    #allocation3 [shape = 's32[1]{0}', space=sflag, size = 0x4, scoped, tag = 'scoped memory for tpu_custom_call.1']
    #allocation4 [shape = 's32[1]{0}', space=sflag, size = 0x4, scoped, tag = 'scoped memory for tpu_custom_call.1']
    #allocation5 [shape = 's32[1]{0}', space=sflag, size = 0x4, scoped, tag = 'scoped memory for tpu_custom_call.1']
    #allocation6 [shape = 'u8[1048576]{0}', space=vmem, size = 0x100000, scoped, tag = 'input window, operand 1, single buffered']
    #allocation7 [shape = 's32[1]{0}', space=sflag, size = 0x4, scoped, tag = 'scoped memory for tpu_custom_call.1']
    #allocation8 [shape = 'u8[262144]{0}', space=vmem, size = 0x40000, scoped, tag = 'input window, operand 3, single buffered']
    #allocation9 [shape = 'u8[16384]{0}', space=vmem, size = 0x4000, scoped, tag = 'output window, operand 0, single buffered']
    #allocation10 [shape = 'u8[512]{0}', space=smem, size = 0x200, scoped, tag = 'output window, operand 1, single buffered']
    %12 = vsyncpa [#allocation3], 0
    %13 = vsyncpa [#allocation7], 0
    %14 = vsyncpa [#allocation4], 0
    %15 = vsyncpa [#allocation5], 0
    // Predicated region
    $region2: #{tpu_custom_call.1} parent=1 // pred_check
      _
    $region3: #{tpu_custom_call.1} parent=1 // pred_check_branch
      %17 = sbr.rel (0) target = $region5
    $region4: #{tpu_custom_call.1} parent=1 // pred_region
      %s19 = ssub.s32 3072, 3072
      %20 = vsyncadd [#allocation3], %s19
      %s21 = sshll.u32 [#allocation2], 4
      %s22 = int_to_ptr.vmem [resolvable:$true] %s21
      %27 = dma.hbm_to_vmem [thread:$0]  %s0, 3072, %s22, [#allocation3], 512, 512, 32
    $region5: #{tpu_custom_call.1} parent=1 // pred_fallthru
      _
    // Predicated region
    $region6: #{tpu_custom_call.1} parent=1 // pred_check
      _
    $region7: #{tpu_custom_call.1} parent=1 // pred_check_branch
      %29 = sbr.rel (0) target = $region9
    $region8: #{tpu_custom_call.1} parent=1 // pred_region
      %s31 = ssub.s32 32768, 32768
      %32 = vsyncadd [#allocation7], %s31
      %s33 = sshll.u32 [#allocation6], 4
      %s34 = int_to_ptr.vmem [resolvable:$true] %s33
      %39 = dma.hbm_to_vmem [thread:$0]  %s1, 32768, %s34, [#allocation7], 256, 256, 16
    $region9: #{tpu_custom_call.1} parent=1 // pred_fallthru
      _
    // Predicated region
    $region10: #{tpu_custom_call.1} parent=1 // pred_check
      _
    $region11: #{tpu_custom_call.1} parent=1 // pred_check_branch
      %41 = sbr.rel (0) target = $region13
    $region12: #{tpu_custom_call.1} parent=1 // pred_region
      _
    $region13: #{tpu_custom_call.1} parent=1 // pred_fallthru
      _
    // Predicated region
    $region14: #{tpu_custom_call.1} parent=1 // pred_check
      _
    $region15: #{tpu_custom_call.1} parent=1 // pred_check_branch
      %43 = sbr.rel (0) target = $region17
    $region16: #{tpu_custom_call.1} parent=1 // pred_region
      %s45 = ssub.s32 8192, 8192
      %46 = vsyncadd [#allocation7], %s45
      %s47 = sshll.u32 [#allocation8], 4
      %s48 = int_to_ptr.vmem [resolvable:$true] %s47
      %53 = dma.hbm_to_vmem [thread:$0]  %s3, 8192, %s48, [#allocation7], 128, 128, 8
    $region17: #{tpu_custom_call.1} parent=1 // pred_fallthru
      _
    // Predicated region
    $region18: #{tpu_custom_call.1} parent=1 // pred_check
      _
    $region19: #{tpu_custom_call.1} parent=1 // pred_check_branch
      %55 = sbr.rel (0) target = $region21
    $region20: #{tpu_custom_call.1} parent=1 // pred_region
      _
    $region21: #{tpu_custom_call.1} parent=1 // pred_fallthru
      _
    // Predicated region
    $region22: #{tpu_custom_call.1} parent=1 // pred_check
      _
    $region23: #{tpu_custom_call.1} parent=1 // pred_check_branch
      %57 = sbr.rel (0) target = $region25
    $region24: #{tpu_custom_call.1} parent=1 // pred_region
      %58 = dma.done [#allocation3], 3072
    $region25: #{tpu_custom_call.1} parent=1 // pred_fallthru
      _
    // Predicated region
    $region26: #{tpu_custom_call.1} parent=1 // pred_check
      _
    $region27: #{tpu_custom_call.1} parent=1 // pred_check_branch
      %60 = sbr.rel (0) target = $region29
    $region28: #{tpu_custom_call.1} parent=1 // pred_region
      %61 = dma.done [#allocation7], 32768
    $region29: #{tpu_custom_call.1} parent=1 // pred_fallthru
      _
    // Predicated region
    $region30: #{tpu_custom_call.1} parent=1 // pred_check
      _
    $region31: #{tpu_custom_call.1} parent=1 // pred_check_branch
      %63 = sbr.rel (0) target = $region33
    $region32: #{tpu_custom_call.1} parent=1 // pred_region
      %64 = dma.done [#allocation7], 8192
    $region33: #{tpu_custom_call.1} parent=1 // pred_fallthru
      _
    %v65 = vld [vmem:[#allocation2] sm:$0xff]
    %v66 = vld [vmem:[#allocation2 + $0x8] sm:$0xff]
    %v67 = vld [vmem:[#allocation2 + $0x10] sm:$0xff]
    %v68 = vld [vmem:[#allocation2 + $0x18] sm:$0xff]
    %v69 = vld [vmem:[#allocation2 + $0x20] sm:$0xff]
    %v70 = vld [vmem:[#allocation2 + $0x28] sm:$0xff]
    %v71 = vld [vmem:[#allocation2 + $0x30] sm:$0xff]
    %v72 = vld [vmem:[#allocation2 + $0x38] sm:$0xff]
    %v73 = vld [vmem:[#allocation2 + $0x40] sm:$0xff]
    %v74 = vld [vmem:[#allocation2 + $0x48] sm:$0xff]
    %v75 = vld [vmem:[#allocation2 + $0x50] sm:$0xff]
    %v76 = vld [vmem:[#allocation2 + $0x58] sm:$0xff]
    %v77 = vld [vmem:[#allocation2 + $0x60] sm:$0xff]
    %v78 = vld [vmem:[#allocation2 + $0x68] sm:$0xff]
    %v79 = vld [vmem:[#allocation2 + $0x70] sm:$0xff]
    %v80 = vld [vmem:[#allocation2 + $0x78] sm:$0xff]
    %v81 = vld [vmem:[#allocation2 + $0x80] sm:$0xff]
    %v82 = vld [vmem:[#allocation2 + $0x88] sm:$0xff]
    %v83 = vld [vmem:[#allocation2 + $0x90] sm:$0xff]
    %v84 = vld [vmem:[#allocation2 + $0x98] sm:$0xff]
    %v85 = vld [vmem:[#allocation2 + $0xa0] sm:$0xff]
    %v86 = vld [vmem:[#allocation2 + $0xa8] sm:$0xff]
    %v87 = vld [vmem:[#allocation2 + $0xb0] sm:$0xff]
    %v88 = vld [vmem:[#allocation2 + $0xb8] sm:$0xff]
    %v89 = vld [vmem:[#allocation6] sm:$0xff]
    %v90 = vld [vmem:[#allocation6 + $0x8] sm:$0xff]
    %v91 = vld [vmem:[#allocation6 + $0x10] sm:$0xff]
    %v92 = vld [vmem:[#allocation6 + $0x18] sm:$0xff]
    %v93 = vld [vmem:[#allocation6 + $0x20] sm:$0xff]
    %v94 = vld [vmem:[#allocation6 + $0x28] sm:$0xff]
    %v95 = vld [vmem:[#allocation6 + $0x30] sm:$0xff]
    %v96 = vld [vmem:[#allocation6 + $0x38] sm:$0xff]
    %v97 = vld [vmem:[#allocation6 + $0x40] sm:$0xff]
    %v98 = vld [vmem:[#allocation6 + $0x48] sm:$0xff]
    %v99 = vld [vmem:[#allocation6 + $0x50] sm:$0xff]
    %v100 = vld [vmem:[#allocation6 + $0x58] sm:$0xff]
    %v101 = vld [vmem:[#allocation6 + $0x60] sm:$0xff]
    %v102 = vld [vmem:[#allocation6 + $0x68] sm:$0xff]
    %v103 = vld [vmem:[#allocation6 + $0x70] sm:$0xff]
    %v104 = vld [vmem:[#allocation6 + $0x78] sm:$0xff]
    %v105 = vld [vmem:[#allocation6 + $0x80] sm:$0xff]
    %v106 = vld [vmem:[#allocation6 + $0x88] sm:$0xff]
    %v107 = vld [vmem:[#allocation6 + $0x90] sm:$0xff]
    %v108 = vld [vmem:[#allocation6 + $0x98] sm:$0xff]
    %v109 = vld [vmem:[#allocation6 + $0xa0] sm:$0xff]
    %v110 = vld [vmem:[#allocation6 + $0xa8] sm:$0xff]
    %v111 = vld [vmem:[#allocation6 + $0xb0] sm:$0xff]
    %v112 = vld [vmem:[#allocation6 + $0xb8] sm:$0xff]
    %v113 = vld [vmem:[#allocation6 + $0xc0] sm:$0xff]
    %v114 = vld [vmem:[#allocation6 + $0xc8] sm:$0xff]
    %v115 = vld [vmem:[#allocation6 + $0xd0] sm:$0xff]
    %v116 = vld [vmem:[#allocation6 + $0xd8] sm:$0xff]
    %v117 = vld [vmem:[#allocation6 + $0xe0] sm:$0xff]
    %v118 = vld [vmem:[#allocation6 + $0xe8] sm:$0xff]
    %v119 = vld [vmem:[#allocation6 + $0xf0] sm:$0xff]
    %v120 = vld [vmem:[#allocation6 + $0xf8] sm:$0xff]
    %v121 = vld [vmem:[#allocation6 + $0x100] sm:$0xff]
    %v122 = vld [vmem:[#allocation6 + $0x108] sm:$0xff]
    %v123 = vld [vmem:[#allocation6 + $0x110] sm:$0xff]
    %v124 = vld [vmem:[#allocation6 + $0x118] sm:$0xff]
    %v125 = vld [vmem:[#allocation6 + $0x120] sm:$0xff]
    %v126 = vld [vmem:[#allocation6 + $0x128] sm:$0xff]
    %v127 = vld [vmem:[#allocation6 + $0x130] sm:$0xff]
    %v128 = vld [vmem:[#allocation6 + $0x138] sm:$0xff]
    %v129 = vld [vmem:[#allocation6 + $0x140] sm:$0xff]
    %v130 = vld [vmem:[#allocation6 + $0x148] sm:$0xff]
    %v131 = vld [vmem:[#allocation6 + $0x150] sm:$0xff]
    %v132 = vld [vmem:[#allocation6 + $0x158] sm:$0xff]
    %v133 = vld [vmem:[#allocation6 + $0x160] sm:$0xff]
    %v134 = vld [vmem:[#allocation6 + $0x168] sm:$0xff]
    %v135 = vld [vmem:[#allocation6 + $0x170] sm:$0xff]
    %v136 = vld [vmem:[#allocation6 + $0x178] sm:$0xff]
    %v137 = vld [vmem:[#allocation6 + $0x180] sm:$0xff]
    %v138 = vld [vmem:[#allocation6 + $0x188] sm:$0xff]
    %v139 = vld [vmem:[#allocation6 + $0x190] sm:$0xff]
    %v140 = vld [vmem:[#allocation6 + $0x198] sm:$0xff]
    %v141 = vld [vmem:[#allocation6 + $0x1a0] sm:$0xff]
    %v142 = vld [vmem:[#allocation6 + $0x1a8] sm:$0xff]
    %v143 = vld [vmem:[#allocation6 + $0x1b0] sm:$0xff]
    %v144 = vld [vmem:[#allocation6 + $0x1b8] sm:$0xff]
    %v145 = vld [vmem:[#allocation6 + $0x1c0] sm:$0xff]
    %v146 = vld [vmem:[#allocation6 + $0x1c8] sm:$0xff]
    %v147 = vld [vmem:[#allocation6 + $0x1d0] sm:$0xff]
    %v148 = vld [vmem:[#allocation6 + $0x1d8] sm:$0xff]
    %v149 = vld [vmem:[#allocation6 + $0x1e0] sm:$0xff]
    %v150 = vld [vmem:[#allocation6 + $0x1e8] sm:$0xff]
    %v151 = vld [vmem:[#allocation6 + $0x1f0] sm:$0xff]
    %v152 = vld [vmem:[#allocation6 + $0x1f8] sm:$0xff]
    %v153 = vld [vmem:[#allocation6 + $0x200] sm:$0xff]
    %v154 = vld [vmem:[#allocation6 + $0x208] sm:$0xff]
    %v155 = vld [vmem:[#allocation6 + $0x210] sm:$0xff]
    %v156 = vld [vmem:[#allocation6 + $0x218] sm:$0xff]
    %v157 = vld [vmem:[#allocation6 + $0x220] sm:$0xff]
    %v158 = vld [vmem:[#allocation6 + $0x228] sm:$0xff]
    %v159 = vld [vmem:[#allocation6 + $0x230] sm:$0xff]
    %v160 = vld [vmem:[#allocation6 + $0x238] sm:$0xff]
    %v161 = vld [vmem:[#allocation6 + $0x240] sm:$0xff]
    %v162 = vld [vmem:[#allocation6 + $0x248] sm:$0xff]
    %v163 = vld [vmem:[#allocation6 + $0x250] sm:$0xff]
    %v164 = vld [vmem:[#allocation6 + $0x258] sm:$0xff]
    %v165 = vld [vmem:[#allocation6 + $0x260] sm:$0xff]
    %v166 = vld [vmem:[#allocation6 + $0x268] sm:$0xff]
    %v167 = vld [vmem:[#allocation6 + $0x270] sm:$0xff]
    %v168 = vld [vmem:[#allocation6 + $0x278] sm:$0xff]
    %v169 = vld [vmem:[#allocation6 + $0x280] sm:$0xff]
    %v170 = vld [vmem:[#allocation6 + $0x288] sm:$0xff]
    %v171 = vld [vmem:[#allocation6 + $0x290] sm:$0xff]
    %v172 = vld [vmem:[#allocation6 + $0x298] sm:$0xff]
    %v173 = vld [vmem:[#allocation6 + $0x2a0] sm:$0xff]
    %v174 = vld [vmem:[#allocation6 + $0x2a8] sm:$0xff]
    %v175 = vld [vmem:[#allocation6 + $0x2b0] sm:$0xff]
    %v176 = vld [vmem:[#allocation6 + $0x2b8] sm:$0xff]
    %v177 = vld [vmem:[#allocation6 + $0x2c0] sm:$0xff]
    %v178 = vld [vmem:[#allocation6 + $0x2c8] sm:$0xff]
    %v179 = vld [vmem:[#allocation6 + $0x2d0] sm:$0xff]
    %v180 = vld [vmem:[#allocation6 + $0x2d8] sm:$0xff]
    %v181 = vld [vmem:[#allocation6 + $0x2e0] sm:$0xff]
    %v182 = vld [vmem:[#allocation6 + $0x2e8] sm:$0xff]
    %v183 = vld [vmem:[#allocation6 + $0x2f0] sm:$0xff]
    %v184 = vld [vmem:[#allocation6 + $0x2f8] sm:$0xff]
    %v185 = vld [vmem:[#allocation6 + $0x300] sm:$0xff]
    %v186 = vld [vmem:[#allocation6 + $0x308] sm:$0xff]
    %v187 = vld [vmem:[#allocation6 + $0x310] sm:$0xff]
    %v188 = vld [vmem:[#allocation6 + $0x318] sm:$0xff]
    %v189 = vld [vmem:[#allocation6 + $0x320] sm:$0xff]
    %v190 = vld [vmem:[#allocation6 + $0x328] sm:$0xff]
    %v191 = vld [vmem:[#allocation6 + $0x330] sm:$0xff]
    %v192 = vld [vmem:[#allocation6 + $0x338] sm:$0xff]
    %v193 = vld [vmem:[#allocation6 + $0x340] sm:$0xff]
    %v194 = vld [vmem:[#allocation6 + $0x348] sm:$0xff]
    %v195 = vld [vmem:[#allocation6 + $0x350] sm:$0xff]
    %v196 = vld [vmem:[#allocation6 + $0x358] sm:$0xff]
    %v197 = vld [vmem:[#allocation6 + $0x360] sm:$0xff]
    %v198 = vld [vmem:[#allocation6 + $0x368] sm:$0xff]
    %v199 = vld [vmem:[#allocation6 + $0x370] sm:$0xff]
    %v200 = vld [vmem:[#allocation6 + $0x378] sm:$0xff]
    %v201 = vld [vmem:[#allocation6 + $0x380] sm:$0xff]
    %v202 = vld [vmem:[#allocation6 + $0x388] sm:$0xff]
    %v203 = vld [vmem:[#allocation6 + $0x390] sm:$0xff]
    %v204 = vld [vmem:[#allocation6 + $0x398] sm:$0xff]
    %v205 = vld [vmem:[#allocation6 + $0x3a0] sm:$0xff]
    %v206 = vld [vmem:[#allocation6 + $0x3a8] sm:$0xff]
    %v207 = vld [vmem:[#allocation6 + $0x3b0] sm:$0xff]
    %v208 = vld [vmem:[#allocation6 + $0x3b8] sm:$0xff]
    %v209 = vld [vmem:[#allocation6 + $0x3c0] sm:$0xff]
    %v210 = vld [vmem:[#allocation6 + $0x3c8] sm:$0xff]
    %v211 = vld [vmem:[#allocation6 + $0x3d0] sm:$0xff]
    %v212 = vld [vmem:[#allocation6 + $0x3d8] sm:$0xff]
    %v213 = vld [vmem:[#allocation6 + $0x3e0] sm:$0xff]
    %v214 = vld [vmem:[#allocation6 + $0x3e8] sm:$0xff]
    %v215 = vld [vmem:[#allocation6 + $0x3f0] sm:$0xff]
    %v216 = vld [vmem:[#allocation6 + $0x3f8] sm:$0xff]
    %v217 = vld [vmem:[#allocation6 + $0x400] sm:$0xff]
    %v218 = vld [vmem:[#allocation6 + $0x408] sm:$0xff]
    %v219 = vld [vmem:[#allocation6 + $0x410] sm:$0xff]
    %v220 = vld [vmem:[#allocation6 + $0x418] sm:$0xff]
    %v221 = vld [vmem:[#allocation6 + $0x420] sm:$0xff]
    %v222 = vld [vmem:[#allocation6 + $0x428] sm:$0xff]
    %v223 = vld [vmem:[#allocation6 + $0x430] sm:$0xff]
    %v224 = vld [vmem:[#allocation6 + $0x438] sm:$0xff]
    %v225 = vld [vmem:[#allocation6 + $0x440] sm:$0xff]
    %v226 = vld [vmem:[#allocation6 + $0x448] sm:$0xff]
    %v227 = vld [vmem:[#allocation6 + $0x450] sm:$0xff]
    %v228 = vld [vmem:[#allocation6 + $0x458] sm:$0xff]
    %v229 = vld [vmem:[#allocation6 + $0x460] sm:$0xff]
    %v230 = vld [vmem:[#allocation6 + $0x468] sm:$0xff]
    %v231 = vld [vmem:[#allocation6 + $0x470] sm:$0xff]
    %v232 = vld [vmem:[#allocation6 + $0x478] sm:$0xff]
    %v233 = vld [vmem:[#allocation6 + $0x480] sm:$0xff]
    %v234 = vld [vmem:[#allocation6 + $0x488] sm:$0xff]
    %v235 = vld [vmem:[#allocation6 + $0x490] sm:$0xff]
    %v236 = vld [vmem:[#allocation6 + $0x498] sm:$0xff]
    %v237 = vld [vmem:[#allocation6 + $0x4a0] sm:$0xff]
    %v238 = vld [vmem:[#allocation6 + $0x4a8] sm:$0xff]
    %v239 = vld [vmem:[#allocation6 + $0x4b0] sm:$0xff]
    %v240 = vld [vmem:[#allocation6 + $0x4b8] sm:$0xff]
    %v241 = vld [vmem:[#allocation6 + $0x4c0] sm:$0xff]
    %v242 = vld [vmem:[#allocation6 + $0x4c8] sm:$0xff]
    %v243 = vld [vmem:[#allocation6 + $0x4d0] sm:$0xff]
    %v244 = vld [vmem:[#allocation6 + $0x4d8] sm:$0xff]
    %v245 = vld [vmem:[#allocation6 + $0x4e0] sm:$0xff]
    %v246 = vld [vmem:[#allocation6 + $0x4e8] sm:$0xff]
    %v247 = vld [vmem:[#allocation6 + $0x4f0] sm:$0xff]
    %v248 = vld [vmem:[#allocation6 + $0x4f8] sm:$0xff]
    %v249 = vld [vmem:[#allocation6 + $0x500] sm:$0xff]
    %v250 = vld [vmem:[#allocation6 + $0x508] sm:$0xff]
    %v251 = vld [vmem:[#allocation6 + $0x510] sm:$0xff]
    %v252 = vld [vmem:[#allocation6 + $0x518] sm:$0xff]
    %v253 = vld [vmem:[#allocation6 + $0x520] sm:$0xff]
    %v254 = vld [vmem:[#allocation6 + $0x528] sm:$0xff]
    %v255 = vld [vmem:[#allocation6 + $0x530] sm:$0xff]
    %v256 = vld [vmem:[#allocation6 + $0x538] sm:$0xff]
    %v257 = vld [vmem:[#allocation6 + $0x540] sm:$0xff]
    %v258 = vld [vmem:[#allocation6 + $0x548] sm:$0xff]
    %v259 = vld [vmem:[#allocation6 + $0x550] sm:$0xff]
    %v260 = vld [vmem:[#allocation6 + $0x558] sm:$0xff]
    %v261 = vld [vmem:[#allocation6 + $0x560] sm:$0xff]
    %v262 = vld [vmem:[#allocation6 + $0x568] sm:$0xff]
    %v263 = vld [vmem:[#allocation6 + $0x570] sm:$0xff]
    %v264 = vld [vmem:[#allocation6 + $0x578] sm:$0xff]
    %v265 = vld [vmem:[#allocation6 + $0x580] sm:$0xff]
    %v266 = vld [vmem:[#allocation6 + $0x588] sm:$0xff]
    %v267 = vld [vmem:[#allocation6 + $0x590] sm:$0xff]
    %v268 = vld [vmem:[#allocation6 + $0x598] sm:$0xff]
    %v269 = vld [vmem:[#allocation6 + $0x5a0] sm:$0xff]
    %v270 = vld [vmem:[#allocation6 + $0x5a8] sm:$0xff]
    %v271 = vld [vmem:[#allocation6 + $0x5b0] sm:$0xff]
    %v272 = vld [vmem:[#allocation6 + $0x5b8] sm:$0xff]
    %v273 = vld [vmem:[#allocation6 + $0x5c0] sm:$0xff]
    %v274 = vld [vmem:[#allocation6 + $0x5c8] sm:$0xff]
    %v275 = vld [vmem:[#allocation6 + $0x5d0] sm:$0xff]
    %v276 = vld [vmem:[#allocation6 + $0x5d8] sm:$0xff]
    %v277 = vld [vmem:[#allocation6 + $0x5e0] sm:$0xff]
    %v278 = vld [vmem:[#allocation6 + $0x5e8] sm:$0xff]
    %v279 = vld [vmem:[#allocation6 + $0x5f0] sm:$0xff]
    %v280 = vld [vmem:[#allocation6 + $0x5f8] sm:$0xff]
    %v281 = vld [vmem:[#allocation6 + $0x600] sm:$0xff]
    %v282 = vld [vmem:[#allocation6 + $0x608] sm:$0xff]
    %v283 = vld [vmem:[#allocation6 + $0x610] sm:$0xff]
    %v284 = vld [vmem:[#allocation6 + $0x618] sm:$0xff]
    %v285 = vld [vmem:[#allocation6 + $0x620] sm:$0xff]
    %v286 = vld [vmem:[#allocation6 + $0x628] sm:$0xff]
    %v287 = vld [vmem:[#allocation6 + $0x630] sm:$0xff]
    %v288 = vld [vmem:[#allocation6 + $0x638] sm:$0xff]
    %v289 = vld [vmem:[#allocation6 + $0x640] sm:$0xff]
    %v290 = vld [vmem:[#allocation6 + $0x648] sm:$0xff]
    %v291 = vld [vmem:[#allocation6 + $0x650] sm:$0xff]
    %v292 = vld [vmem:[#allocation6 + $0x658] sm:$0xff]
    %v293 = vld [vmem:[#allocation6 + $0x660] sm:$0xff]
    %v294 = vld [vmem:[#allocation6 + $0x668] sm:$0xff]
    %v295 = vld [vmem:[#allocation6 + $0x670] sm:$0xff]
    %v296 = vld [vmem:[#allocation6 + $0x678] sm:$0xff]
    %v297 = vld [vmem:[#allocation6 + $0x680] sm:$0xff]
    %v298 = vld [vmem:[#allocation6 + $0x688] sm:$0xff]
    %v299 = vld [vmem:[#allocation6 + $0x690] sm:$0xff]
    %v300 = vld [vmem:[#allocation6 + $0x698] sm:$0xff]
    %v301 = vld [vmem:[#allocation6 + $0x6a0] sm:$0xff]
    %v302 = vld [vmem:[#allocation6 + $0x6a8] sm:$0xff]
    %v303 = vld [vmem:[#allocation6 + $0x6b0] sm:$0xff]
    %v304 = vld [vmem:[#allocation6 + $0x6b8] sm:$0xff]
    %v305 = vld [vmem:[#allocation6 + $0x6c0] sm:$0xff]
    %v306 = vld [vmem:[#allocation6 + $0x6c8] sm:$0xff]
    %v307 = vld [vmem:[#allocation6 + $0x6d0] sm:$0xff]
    %v308 = vld [vmem:[#allocation6 + $0x6d8] sm:$0xff]
    %v309 = vld [vmem:[#allocation6 + $0x6e0] sm:$0xff]
    %v310 = vld [vmem:[#allocation6 + $0x6e8] sm:$0xff]
    %v311 = vld [vmem:[#allocation6 + $0x6f0] sm:$0xff]
    %v312 = vld [vmem:[#allocation6 + $0x6f8] sm:$0xff]
    %v313 = vld [vmem:[#allocation6 + $0x700] sm:$0xff]
    %v314 = vld [vmem:[#allocation6 + $0x708] sm:$0xff]
    %v315 = vld [vmem:[#allocation6 + $0x710] sm:$0xff]
    %v316 = vld [vmem:[#allocation6 + $0x718] sm:$0xff]
    %v317 = vld [vmem:[#allocation6 + $0x720] sm:$0xff]
    %v318 = vld [vmem:[#allocation6 + $0x728] sm:$0xff]
    %v319 = vld [vmem:[#allocation6 + $0x730] sm:$0xff]
    %v320 = vld [vmem:[#allocation6 + $0x738] sm:$0xff]
    %v321 = vld [vmem:[#allocation6 + $0x740] sm:$0xff]
    %v322 = vld [vmem:[#allocation6 + $0x748] sm:$0xff]
    %v323 = vld [vmem:[#allocation6 + $0x750] sm:$0xff]
    %v324 = vld [vmem:[#allocation6 + $0x758] sm:$0xff]
    %v325 = vld [vmem:[#allocation6 + $0x760] sm:$0xff]
    %v326 = vld [vmem:[#allocation6 + $0x768] sm:$0xff]
    %v327 = vld [vmem:[#allocation6 + $0x770] sm:$0xff]
    %v328 = vld [vmem:[#allocation6 + $0x778] sm:$0xff]
    %v329 = vld [vmem:[#allocation6 + $0x780] sm:$0xff]
    %v330 = vld [vmem:[#allocation6 + $0x788] sm:$0xff]
    %v331 = vld [vmem:[#allocation6 + $0x790] sm:$0xff]
    %v332 = vld [vmem:[#allocation6 + $0x798] sm:$0xff]
    %v333 = vld [vmem:[#allocation6 + $0x7a0] sm:$0xff]
    %v334 = vld [vmem:[#allocation6 + $0x7a8] sm:$0xff]
    %v335 = vld [vmem:[#allocation6 + $0x7b0] sm:$0xff]
    %v336 = vld [vmem:[#allocation6 + $0x7b8] sm:$0xff]
    %v337 = vld [vmem:[#allocation6 + $0x7c0] sm:$0xff]
    %v338 = vld [vmem:[#allocation6 + $0x7c8] sm:$0xff]
    %v339 = vld [vmem:[#allocation6 + $0x7d0] sm:$0xff]
    %v340 = vld [vmem:[#allocation6 + $0x7d8] sm:$0xff]
    %v341 = vld [vmem:[#allocation6 + $0x7e0] sm:$0xff]
    %v342 = vld [vmem:[#allocation6 + $0x7e8] sm:$0xff]
    %v343 = vld [vmem:[#allocation6 + $0x7f0] sm:$0xff]
    %v344 = vld [vmem:[#allocation6 + $0x7f8] sm:$0xff]
    %v345 = vld [vmem:[%s2] sm:$0xf]
    %v347 = vlaneseq
    %v348 = vshrl.u32 %v347, 7
    %v349 = vsub.s32 0, %v348
    %v350 = vrot.slane %v345, %v349
    %v351 = vlaneseq
    %v352 = vshrl.u32 %v351, 7
    %v353 = vsub.s32 1, %v352
    %v354 = vrot.slane %v345, %v353
    %v355 = vlaneseq
    %v356 = vshrl.u32 %v355, 7
    %v357 = vsub.s32 2, %v356
    %v358 = vrot.slane %v345, %v357
    %v359 = vlaneseq
    %v360 = vshrl.u32 %v359, 7
    %v361 = vsub.s32 3, %v360
    %v362 = vrot.slane %v345, %v361
    %v391 = vunpack.c.l.b16 %v65
    %v392 = vunpack.c.h.b16 %v65
    %v393 = vunpack.c.l.b16 %v66
    %v394 = vunpack.c.h.b16 %v66
    %v395 = vunpack.c.l.b16 %v67
    %v396 = vunpack.c.h.b16 %v67
    %v397 = vunpack.c.l.b16 %v68
    %v398 = vunpack.c.h.b16 %v68
    %v399 = vunpack.c.l.b16 %v69
    %v400 = vunpack.c.h.b16 %v69
    %v401 = vunpack.c.l.b16 %v70
    %v402 = vunpack.c.h.b16 %v70
    %v403 = vunpack.c.l.b16 %v71
    %v404 = vunpack.c.h.b16 %v71
    %v405 = vunpack.c.l.b16 %v72
    %v406 = vunpack.c.h.b16 %v72
    %v407 = vunpack.c.l.b16 %v73
    %v408 = vunpack.c.h.b16 %v73
    %v409 = vunpack.c.l.b16 %v74
    %v410 = vunpack.c.h.b16 %v74
    %v411 = vunpack.c.l.b16 %v75
    %v412 = vunpack.c.h.b16 %v75
    %v413 = vunpack.c.l.b16 %v76
    %v414 = vunpack.c.h.b16 %v76
    %v415 = vunpack.c.l.b16 %v77
    %v416 = vunpack.c.h.b16 %v77
    %v417 = vunpack.c.l.b16 %v78
    %v418 = vunpack.c.h.b16 %v78
    %v419 = vunpack.c.l.b16 %v79
    %v420 = vunpack.c.h.b16 %v79
    %v421 = vunpack.c.l.b16 %v80
    %v422 = vunpack.c.h.b16 %v80
    %v423 = vunpack.c.l.b16 %v81
    %v424 = vunpack.c.h.b16 %v81
    %v425 = vunpack.c.l.b16 %v82
    %v426 = vunpack.c.h.b16 %v82
    %v427 = vunpack.c.l.b16 %v83
    %v428 = vunpack.c.h.b16 %v83
    %v429 = vunpack.c.l.b16 %v84
    %v430 = vunpack.c.h.b16 %v84
    %v431 = vunpack.c.l.b16 %v85
    %v432 = vunpack.c.h.b16 %v85
    %v433 = vunpack.c.l.b16 %v86
    %v434 = vunpack.c.h.b16 %v86
    %v435 = vunpack.c.l.b16 %v87
    %v436 = vunpack.c.h.b16 %v87
    %v437 = vunpack.c.l.b16 %v88
    %v438 = vunpack.c.h.b16 %v88
    %v439 = vpack.c.b16 %v399, %v391
    %v440 = vpack.c.b16 %v400, %v392
    %v441 = vpack.c.b16 %v401, %v393
    %v442 = vpack.c.b16 %v402, %v394
    %v443 = vpack.c.b16 %v403, %v395
    %v444 = vpack.c.b16 %v404, %v396
    %v445 = vpack.c.b16 %v405, %v397
    %v446 = vpack.c.b16 %v406, %v398
    %v447 = vpack.c.b16 %v415, %v407
    %v448 = vpack.c.b16 %v416, %v408
    %v449 = vpack.c.b16 %v417, %v409
    %v450 = vpack.c.b16 %v418, %v410
    %v451 = vpack.c.b16 %v419, %v411
    %v452 = vpack.c.b16 %v420, %v412
    %v453 = vpack.c.b16 %v421, %v413
    %v454 = vpack.c.b16 %v422, %v414
    %v455 = vpack.c.b16 %v431, %v423
    %v456 = vpack.c.b16 %v432, %v424
    %v457 = vpack.c.b16 %v433, %v425
    %v458 = vpack.c.b16 %v434, %v426
    %v459 = vpack.c.b16 %v435, %v427
    %v460 = vpack.c.b16 %v436, %v428
    %v461 = vpack.c.b16 %v437, %v429
    %v462 = vpack.c.b16 %v438, %v430
    %v743 = vunpack.c.l.b16 %v89
    %v744 = vunpack.c.h.b16 %v89
    %v745 = vunpack.c.l.b16 %v90
    %v746 = vunpack.c.h.b16 %v90
    %v747 = vunpack.c.l.b16 %v91
    %v748 = vunpack.c.h.b16 %v91
    %v749 = vunpack.c.l.b16 %v92
    %v750 = vunpack.c.h.b16 %v92
    %v751 = vunpack.c.l.b16 %v93
    %v752 = vunpack.c.h.b16 %v93
    %v753 = vunpack.c.l.b16 %v94
    %v754 = vunpack.c.h.b16 %v94
    %v755 = vunpack.c.l.b16 %v95
    %v756 = vunpack.c.h.b16 %v95
    %v757 = vunpack.c.l.b16 %v96
    %v758 = vunpack.c.h.b16 %v96
    %v759 = vunpack.c.l.b16 %v97
    %v760 = vunpack.c.h.b16 %v97
    %v761 = vunpack.c.l.b16 %v98
    %v762 = vunpack.c.h.b16 %v98
    %v763 = vunpack.c.l.b16 %v99
    %v764 = vunpack.c.h.b16 %v99
    %v765 = vunpack.c.l.b16 %v100
    %v766 = vunpack.c.h.b16 %v100
    %v767 = vunpack.c.l.b16 %v101
    %v768 = vunpack.c.h.b16 %v101
    %v769 = vunpack.c.l.b16 %v102
    %v770 = vunpack.c.h.b16 %v102
    %v771 = vunpack.c.l.b16 %v103
    %v772 = vunpack.c.h.b16 %v103
    %v773 = vunpack.c.l.b16 %v104
    %v774 = vunpack.c.h.b16 %v104
    %v775 = vunpack.c.l.b16 %v105
    %v776 = vunpack.c.h.b16 %v105
    %v777 = vunpack.c.l.b16 %v106
    %v778 = vunpack.c.h.b16 %v106
    %v779 = vunpack.c.l.b16 %v107
    %v780 = vunpack.c.h.b16 %v107
    %v781 = vunpack.c.l.b16 %v108
    %v782 = vunpack.c.h.b16 %v108
    %v783 = vunpack.c.l.b16 %v109
    %v784 = vunpack.c.h.b16 %v109
    %v785 = vunpack.c.l.b16 %v110
    %v786 = vunpack.c.h.b16 %v110
    %v787 = vunpack.c.l.b16 %v111
    %v788 = vunpack.c.h.b16 %v111
    %v789 = vunpack.c.l.b16 %v112
    %v790 = vunpack.c.h.b16 %v112
    %v791 = vunpack.c.l.b16 %v113
    %v792 = vunpack.c.h.b16 %v113
    %v793 = vunpack.c.l.b16 %v114
    %v794 = vunpack.c.h.b16 %v114
    %v795 = vunpack.c.l.b16 %v115
    %v796 = vunpack.c.h.b16 %v115
    %v797 = vunpack.c.l.b16 %v116
    %v798 = vunpack.c.h.b16 %v116
    %v799 = vunpack.c.l.b16 %v117
    %v800 = vunpack.c.h.b16 %v117
    %v801 = vunpack.c.l.b16 %v118
    %v802 = vunpack.c.h.b16 %v118
    %v803 = vunpack.c.l.b16 %v119
    %v804 = vunpack.c.h.b16 %v119
    %v805 = vunpack.c.l.b16 %v120
    %v806 = vunpack.c.h.b16 %v120
    %v807 = vunpack.c.l.b16 %v121
    %v808 = vunpack.c.h.b16 %v121
    %v809 = vunpack.c.l.b16 %v122
    %v810 = vunpack.c.h.b16 %v122
    %v811 = vunpack.c.l.b16 %v123
    %v812 = vunpack.c.h.b16 %v123
    %v813 = vunpack.c.l.b16 %v124
    %v814 = vunpack.c.h.b16 %v124
    %v815 = vunpack.c.l.b16 %v125
    %v816 = vunpack.c.h.b16 %v125
    %v817 = vunpack.c.l.b16 %v126
    %v818 = vunpack.c.h.b16 %v126
    %v819 = vunpack.c.l.b16 %v127
    %v820 = vunpack.c.h.b16 %v127
    %v821 = vunpack.c.l.b16 %v128
    %v822 = vunpack.c.h.b16 %v128
    %v823 = vunpack.c.l.b16 %v129
    %v824 = vunpack.c.h.b16 %v129
    %v825 = vunpack.c.l.b16 %v130
    %v826 = vunpack.c.h.b16 %v130
    %v827 = vunpack.c.l.b16 %v131
    %v828 = vunpack.c.h.b16 %v131
    %v829 = vunpack.c.l.b16 %v132
    %v830 = vunpack.c.h.b16 %v132
    %v831 = vunpack.c.l.b16 %v133
    %v832 = vunpack.c.h.b16 %v133
    %v833 = vunpack.c.l.b16 %v134
    %v834 = vunpack.c.h.b16 %v134
    %v835 = vunpack.c.l.b16 %v135
    %v836 = vunpack.c.h.b16 %v135
    %v837 = vunpack.c.l.b16 %v136
    %v838 = vunpack.c.h.b16 %v136
    %v839 = vunpack.c.l.b16 %v137
    %v840 = vunpack.c.h.b16 %v137
    %v841 = vunpack.c.l.b16 %v138
    %v842 = vunpack.c.h.b16 %v138
    %v843 = vunpack.c.l.b16 %v139
    %v844 = vunpack.c.h.b16 %v139
    %v845 = vunpack.c.l.b16 %v140
    %v846 = vunpack.c.h.b16 %v140
    %v847 = vunpack.c.l.b16 %v141
    %v848 = vunpack.c.h.b16 %v141
    %v849 = vunpack.c.l.b16 %v142
    %v850 = vunpack.c.h.b16 %v142
    %v851 = vunpack.c.l.b16 %v143
    %v852 = vunpack.c.h.b16 %v143
    %v853 = vunpack.c.l.b16 %v144
    %v854 = vunpack.c.h.b16 %v144
    %v855 = vunpack.c.l.b16 %v145
    %v856 = vunpack.c.h.b16 %v145
    %v857 = vunpack.c.l.b16 %v146
    %v858 = vunpack.c.h.b16 %v146
    %v859 = vunpack.c.l.b16 %v147
    %v860 = vunpack.c.h.b16 %v147
    %v861 = vunpack.c.l.b16 %v148
    %v862 = vunpack.c.h.b16 %v148
    %v863 = vunpack.c.l.b16 %v149
    %v864 = vunpack.c.h.b16 %v149
    %v865 = vunpack.c.l.b16 %v150
    %v866 = vunpack.c.h.b16 %v150
    %v867 = vunpack.c.l.b16 %v151
    %v868 = vunpack.c.h.b16 %v151
    %v869 = vunpack.c.l.b16 %v152
    %v870 = vunpack.c.h.b16 %v152
    %v871 = vunpack.c.l.b16 %v153
    %v872 = vunpack.c.h.b16 %v153
    %v873 = vunpack.c.l.b16 %v154
    %v874 = vunpack.c.h.b16 %v154
    %v875 = vunpack.c.l.b16 %v155
    %v876 = vunpack.c.h.b16 %v155
    %v877 = vunpack.c.l.b16 %v156
    %v878 = vunpack.c.h.b16 %v156
    %v879 = vunpack.c.l.b16 %v157
    %v880 = vunpack.c.h.b16 %v157
    %v881 = vunpack.c.l.b16 %v158
    %v882 = vunpack.c.h.b16 %v158
    %v883 = vunpack.c.l.b16 %v159
    %v884 = vunpack.c.h.b16 %v159
    %v885 = vunpack.c.l.b16 %v160
    %v886 = vunpack.c.h.b16 %v160
    %v887 = vunpack.c.l.b16 %v161
    %v888 = vunpack.c.h.b16 %v161
    %v889 = vunpack.c.l.b16 %v162
    %v890 = vunpack.c.h.b16 %v162
    %v891 = vunpack.c.l.b16 %v163
    %v892 = vunpack.c.h.b16 %v163
    %v893 = vunpack.c.l.b16 %v164
    %v894 = vunpack.c.h.b16 %v164
    %v895 = vunpack.c.l.b16 %v165
    %v896 = vunpack.c.h.b16 %v165
    %v897 = vunpack.c.l.b16 %v166
    %v898 = vunpack.c.h.b16 %v166
    %v899 = vunpack.c.l.b16 %v167
    %v900 = vunpack.c.h.b16 %v167
    %v901 = vunpack.c.l.b16 %v168
    %v902 = vunpack.c.h.b16 %v168
    %v903 = vunpack.c.l.b16 %v169
    %v904 = vunpack.c.h.b16 %v169
    %v905 = vunpack.c.l.b16 %v170
    %v906 = vunpack.c.h.b16 %v170
    %v907 = vunpack.c.l.b16 %v171
    %v908 = vunpack.c.h.b16 %v171
    %v909 = vunpack.c.l.b16 %v172
    %v910 = vunpack.c.h.b16 %v172
    %v911 = vunpack.c.l.b16 %v173
    %v912 = vunpack.c.h.b16 %v173
    %v913 = vunpack.c.l.b16 %v174
    %v914 = vunpack.c.h.b16 %v174
    %v915 = vunpack.c.l.b16 %v175
    %v916 = vunpack.c.h.b16 %v175
    %v917 = vunpack.c.l.b16 %v176
    %v918 = vunpack.c.h.b16 %v176
    %v919 = vunpack.c.l.b16 %v177
    %v920 = vunpack.c.h.b16 %v177
    %v921 = vunpack.c.l.b16 %v178
    %v922 = vunpack.c.h.b16 %v178
    %v923 = vunpack.c.l.b16 %v179
    %v924 = vunpack.c.h.b16 %v179
    %v925 = vunpack.c.l.b16 %v180
    %v926 = vunpack.c.h.b16 %v180
    %v927 = vunpack.c.l.b16 %v181
    %v928 = vunpack.c.h.b16 %v181
    %v929 = vunpack.c.l.b16 %v182
    %v930 = vunpack.c.h.b16 %v182
    %v931 = vunpack.c.l.b16 %v183
    %v932 = vunpack.c.h.b16 %v183
    %v933 = vunpack.c.l.b16 %v184
    %v934 = vunpack.c.h.b16 %v184
    %v935 = vunpack.c.l.b16 %v185
    %v936 = vunpack.c.h.b16 %v185
    %v937 = vunpack.c.l.b16 %v186
    %v938 = vunpack.c.h.b16 %v186
    %v939 = vunpack.c.l.b16 %v187
    %v940 = vunpack.c.h.b16 %v187
    %v941 = vunpack.c.l.b16 %v188
    %v942 = vunpack.c.h.b16 %v188
    %v943 = vunpack.c.l.b16 %v189
    %v944 = vunpack.c.h.b16 %v189
    %v945 = vunpack.c.l.b16 %v190
    %v946 = vunpack.c.h.b16 %v190
    %v947 = vunpack.c.l.b16 %v191
    %v948 = vunpack.c.h.b16 %v191
    %v949 = vunpack.c.l.b16 %v192
    %v950 = vunpack.c.h.b16 %v192
    %v951 = vunpack.c.l.b16 %v193
    %v952 = vunpack.c.h.b16 %v193
    %v953 = vunpack.c.l.b16 %v194
    %v954 = vunpack.c.h.b16 %v194
    %v955 = vunpack.c.l.b16 %v195
    %v956 = vunpack.c.h.b16 %v195
    %v957 = vunpack.c.l.b16 %v196
    %v958 = vunpack.c.h.b16 %v196
    %v959 = vunpack.c.l.b16 %v197
    %v960 = vunpack.c.h.b16 %v197
    %v961 = vunpack.c.l.b16 %v198
    %v962 = vunpack.c.h.b16 %v198
    %v963 = vunpack.c.l.b16 %v199
    %v964 = vunpack.c.h.b16 %v199
    %v965 = vunpack.c.l.b16 %v200
    %v966 = vunpack.c.h.b16 %v200
    %v967 = vunpack.c.l.b16 %v201
    %v968 = vunpack.c.h.b16 %v201
    %v969 = vunpack.c.l.b16 %v202
    %v970 = vunpack.c.h.b16 %v202
    %v971 = vunpack.c.l.b16 %v203
    %v972 = vunpack.c.h.b16 %v203
    %v973 = vunpack.c.l.b16 %v204
    %v974 = vunpack.c.h.b16 %v204
    %v975 = vunpack.c.l.b16 %v205
    %v976 = vunpack.c.h.b16 %v205
    %v977 = vunpack.c.l.b16 %v206
    %v978 = vunpack.c.h.b16 %v206
    %v979 = vunpack.c.l.b16 %v207
    %v980 = vunpack.c.h.b16 %v207
    %v981 = vunpack.c.l.b16 %v208
    %v982 = vunpack.c.h.b16 %v208
    %v983 = vunpack.c.l.b16 %v209
    %v984 = vunpack.c.h.b16 %v209
    %v985 = vunpack.c.l.b16 %v210
    %v986 = vunpack.c.h.b16 %v210
    %v987 = vunpack.c.l.b16 %v211
    %v988 = vunpack.c.h.b16 %v211
    %v989 = vunpack.c.l.b16 %v212
    %v990 = vunpack.c.h.b16 %v212
    %v991 = vunpack.c.l.b16 %v213
    %v992 = vunpack.c.h.b16 %v213
    %v993 = vunpack.c.l.b16 %v214
    %v994 = vunpack.c.h.b16 %v214
    %v995 = vunpack.c.l.b16 %v215
    %v996 = vunpack.c.h.b16 %v215
    %v997 = vunpack.c.l.b16 %v216
    %v998 = vunpack.c.h.b16 %v216
    %v999 = vunpack.c.l.b16 %v217
    %v1000 = vunpack.c.h.b16 %v217
    %v1001 = vunpack.c.l.b16 %v218
    %v1002 = vunpack.c.h.b16 %v218
    %v1003 = vunpack.c.l.b16 %v219
    %v1004 = vunpack.c.h.b16 %v219
    %v1005 = vunpack.c.l.b16 %v220
    %v1006 = vunpack.c.h.b16 %v220
    %v1007 = vunpack.c.l.b16 %v221
    %v1008 = vunpack.c.h.b16 %v221
    %v1009 = vunpack.c.l.b16 %v222
    %v1010 = vunpack.c.h.b16 %v222
    %v1011 = vunpack.c.l.b16 %v223
    %v1012 = vunpack.c.h.b16 %v223
    %v1013 = vunpack.c.l.b16 %v224
    %v1014 = vunpack.c.h.b16 %v224
    %v1015 = vunpack.c.l.b16 %v225
    %v1016 = vunpack.c.h.b16 %v225
    %v1017 = vunpack.c.l.b16 %v226
    %v1018 = vunpack.c.h.b16 %v226
    %v1019 = vunpack.c.l.b16 %v227
    %v1020 = vunpack.c.h.b16 %v227
    %v1021 = vunpack.c.l.b16 %v228
    %v1022 = vunpack.c.h.b16 %v228
    %v1023 = vunpack.c.l.b16 %v229
    %v1024 = vunpack.c.h.b16 %v229
    %v1025 = vunpack.c.l.b16 %v230
    %v1026 = vunpack.c.h.b16 %v230
    %v1027 = vunpack.c.l.b16 %v231
    %v1028 = vunpack.c.h.b16 %v231
    %v1029 = vunpack.c.l.b16 %v232
    %v1030 = vunpack.c.h.b16 %v232
    %v1031 = vunpack.c.l.b16 %v233
    %v1032 = vunpack.c.h.b16 %v233
    %v1033 = vunpack.c.l.b16 %v234
    %v1034 = vunpack.c.h.b16 %v234
    %v1035 = vunpack.c.l.b16 %v235
    %v1036 = vunpack.c.h.b16 %v235
    %v1037 = vunpack.c.l.b16 %v236
    %v1038 = vunpack.c.h.b16 %v236
    %v1039 = vunpack.c.l.b16 %v237
    %v1040 = vunpack.c.h.b16 %v237
    %v1041 = vunpack.c.l.b16 %v238
    %v1042 = vunpack.c.h.b16 %v238
    %v1043 = vunpack.c.l.b16 %v239
    %v1044 = vunpack.c.h.b16 %v239
    %v1045 = vunpack.c.l.b16 %v240
    %v1046 = vunpack.c.h.b16 %v240
    %v1047 = vunpack.c.l.b16 %v241
    %v1048 = vunpack.c.h.b16 %v241
    %v1049 = vunpack.c.l.b16 %v242
    %v1050 = vunpack.c.h.b16 %v242
    %v1051 = vunpack.c.l.b16 %v243
    %v1052 = vunpack.c.h.b16 %v243
    %v1053 = vunpack.c.l.b16 %v244
    %v1054 = vunpack.c.h.b16 %v244
    %v1055 = vunpack.c.l.b16 %v245
    %v1056 = vunpack.c.h.b16 %v245
    %v1057 = vunpack.c.l.b16 %v246
    %v1058 = vunpack.c.h.b16 %v246
    %v1059 = vunpack.c.l.b16 %v247
    %v1060 = vunpack.c.h.b16 %v247
    %v1061 = vunpack.c.l.b16 %v248
    %v1062 = vunpack.c.h.b16 %v248
    %v1063 = vunpack.c.l.b16 %v249
    %v1064 = vunpack.c.h.b16 %v249
    %v1065 = vunpack.c.l.b16 %v250
    %v1066 = vunpack.c.h.b16 %v250
    %v1067 = vunpack.c.l.b16 %v251
    %v1068 = vunpack.c.h.b16 %v251
    %v1069 = vunpack.c.l.b16 %v252
    %v1070 = vunpack.c.h.b16 %v252
    %v1071 = vunpack.c.l.b16 %v253
    %v1072 = vunpack.c.h.b16 %v253
    %v1073 = vunpack.c.l.b16 %v254
    %v1074 = vunpack.c.h.b16 %v254
    %v1075 = vunpack.c.l.b16 %v255
    %v1076 = vunpack.c.h.b16 %v255
    %v1077 = vunpack.c.l.b16 %v256
    %v1078 = vunpack.c.h.b16 %v256
    %v1079 = vunpack.c.l.b16 %v257
    %v1080 = vunpack.c.h.b16 %v257
    %v1081 = vunpack.c.l.b16 %v258
    %v1082 = vunpack.c.h.b16 %v258
    %v1083 = vunpack.c.l.b16 %v259
    %v1084 = vunpack.c.h.b16 %v259
    %v1085 = vunpack.c.l.b16 %v260
    %v1086 = vunpack.c.h.b16 %v260
    %v1087 = vunpack.c.l.b16 %v261
    %v1088 = vunpack.c.h.b16 %v261
    %v1089 = vunpack.c.l.b16 %v262
    %v1090 = vunpack.c.h.b16 %v262
    %v1091 = vunpack.c.l.b16 %v263
    %v1092 = vunpack.c.h.b16 %v263
    %v1093 = vunpack.c.l.b16 %v264
    %v1094 = vunpack.c.h.b16 %v264
    %v1095 = vunpack.c.l.b16 %v265
    %v1096 = vunpack.c.h.b16 %v265
    %v1097 = vunpack.c.l.b16 %v266
    %v1098 = vunpack.c.h.b16 %v266
    %v1099 = vunpack.c.l.b16 %v267
    %v1100 = vunpack.c.h.b16 %v267
    %v1101 = vunpack.c.l.b16 %v268
    %v1102 = vunpack.c.h.b16 %v268
    %v1103 = vunpack.c.l.b16 %v269
    %v1104 = vunpack.c.h.b16 %v269
    %v1105 = vunpack.c.l.b16 %v270
    %v1106 = vunpack.c.h.b16 %v270
    %v1107 = vunpack.c.l.b16 %v271
    %v1108 = vunpack.c.h.b16 %v271
    %v1109 = vunpack.c.l.b16 %v272
    %v1110 = vunpack.c.h.b16 %v272
    %v1111 = vunpack.c.l.b16 %v273
    %v1112 = vunpack.c.h.b16 %v273
    %v1113 = vunpack.c.l.b16 %v274
    %v1114 = vunpack.c.h.b16 %v274
    %v1115 = vunpack.c.l.b16 %v275
    %v1116 = vunpack.c.h.b16 %v275
    %v1117 = vunpack.c.l.b16 %v276
    %v1118 = vunpack.c.h.b16 %v276
    %v1119 = vunpack.c.l.b16 %v277
    %v1120 = vunpack.c.h.b16 %v277
    %v1121 = vunpack.c.l.b16 %v278
    %v1122 = vunpack.c.h.b16 %v278
    %v1123 = vunpack.c.l.b16 %v279
    %v1124 = vunpack.c.h.b16 %v279
    %v1125 = vunpack.c.l.b16 %v280
    %v1126 = vunpack.c.h.b16 %v280
    %v1127 = vunpack.c.l.b16 %v281
    %v1128 = vunpack.c.h.b16 %v281
    %v1129 = vunpack.c.l.b16 %v282
    %v1130 = vunpack.c.h.b16 %v282
    %v1131 = vunpack.c.l.b16 %v283
    %v1132 = vunpack.c.h.b16 %v283
    %v1133 = vunpack.c.l.b16 %v284
    %v1134 = vunpack.c.h.b16 %v284
    %v1135 = vunpack.c.l.b16 %v285
    %v1136 = vunpack.c.h.b16 %v285
    %v1137 = vunpack.c.l.b16 %v286
    %v1138 = vunpack.c.h.b16 %v286
    %v1139 = vunpack.c.l.b16 %v287
    %v1140 = vunpack.c.h.b16 %v287
    %v1141 = vunpack.c.l.b16 %v288
    %v1142 = vunpack.c.h.b16 %v288
    %v1143 = vunpack.c.l.b16 %v289
    %v1144 = vunpack.c.h.b16 %v289
    %v1145 = vunpack.c.l.b16 %v290
    %v1146 = vunpack.c.h.b16 %v290
    %v1147 = vunpack.c.l.b16 %v291
    %v1148 = vunpack.c.h.b16 %v291
    %v1149 = vunpack.c.l.b16 %v292
    %v1150 = vunpack.c.h.b16 %v292
    %v1151 = vunpack.c.l.b16 %v293
    %v1152 = vunpack.c.h.b16 %v293
    %v1153 = vunpack.c.l.b16 %v294
    %v1154 = vunpack.c.h.b16 %v294
    %v1155 = vunpack.c.l.b16 %v295
    %v1156 = vunpack.c.h.b16 %v295
    %v1157 = vunpack.c.l.b16 %v296
    %v1158 = vunpack.c.h.b16 %v296
    %v1159 = vunpack.c.l.b16 %v297
    %v1160 = vunpack.c.h.b16 %v297
    %v1161 = vunpack.c.l.b16 %v298
    %v1162 = vunpack.c.h.b16 %v298
    %v1163 = vunpack.c.l.b16 %v299
    %v1164 = vunpack.c.h.b16 %v299
    %v1165 = vunpack.c.l.b16 %v300
    %v1166 = vunpack.c.h.b16 %v300
    %v1167 = vunpack.c.l.b16 %v301
    %v1168 = vunpack.c.h.b16 %v301
    %v1169 = vunpack.c.l.b16 %v302
    %v1170 = vunpack.c.h.b16 %v302
    %v1171 = vunpack.c.l.b16 %v303
    %v1172 = vunpack.c.h.b16 %v303
    %v1173 = vunpack.c.l.b16 %v304
    %v1174 = vunpack.c.h.b16 %v304
    %v1175 = vunpack.c.l.b16 %v305
    %v1176 = vunpack.c.h.b16 %v305
    %v1177 = vunpack.c.l.b16 %v306
    %v1178 = vunpack.c.h.b16 %v306
    %v1179 = vunpack.c.l.b16 %v307
    %v1180 = vunpack.c.h.b16 %v307
    %v1181 = vunpack.c.l.b16 %v308
    %v1182 = vunpack.c.h.b16 %v308
    %v1183 = vunpack.c.l.b16 %v309
    %v1184 = vunpack.c.h.b16 %v309
    %v1185 = vunpack.c.l.b16 %v310
    %v1186 = vunpack.c.h.b16 %v310
    %v1187 = vunpack.c.l.b16 %v311
    %v1188 = vunpack.c.h.b16 %v311
    %v1189 = vunpack.c.l.b16 %v312
    %v1190 = vunpack.c.h.b16 %v312
    %v1191 = vunpack.c.l.b16 %v313
    %v1192 = vunpack.c.h.b16 %v313
    %v1193 = vunpack.c.l.b16 %v314
    %v1194 = vunpack.c.h.b16 %v314
    %v1195 = vunpack.c.l.b16 %v315
    %v1196 = vunpack.c.h.b16 %v315
    %v1197 = vunpack.c.l.b16 %v316
    %v1198 = vunpack.c.h.b16 %v316
    %v1199 = vunpack.c.l.b16 %v317
    %v1200 = vunpack.c.h.b16 %v317
    %v1201 = vunpack.c.l.b16 %v318
    %v1202 = vunpack.c.h.b16 %v318
    %v1203 = vunpack.c.l.b16 %v319
    %v1204 = vunpack.c.h.b16 %v319
    %v1205 = vunpack.c.l.b16 %v320
    %v1206 = vunpack.c.h.b16 %v320
    %v1207 = vunpack.c.l.b16 %v321
    %v1208 = vunpack.c.h.b16 %v321
    %v1209 = vunpack.c.l.b16 %v322
    %v1210 = vunpack.c.h.b16 %v322
    %v1211 = vunpack.c.l.b16 %v323
    %v1212 = vunpack.c.h.b16 %v323
    %v1213 = vunpack.c.l.b16 %v324
    %v1214 = vunpack.c.h.b16 %v324
    %v1215 = vunpack.c.l.b16 %v325
    %v1216 = vunpack.c.h.b16 %v325
    %v1217 = vunpack.c.l.b16 %v326
    %v1218 = vunpack.c.h.b16 %v326
    %v1219 = vunpack.c.l.b16 %v327
    %v1220 = vunpack.c.h.b16 %v327
    %v1221 = vunpack.c.l.b16 %v328
    %v1222 = vunpack.c.h.b16 %v328
    %v1223 = vunpack.c.l.b16 %v329
    %v1224 = vunpack.c.h.b16 %v329
    %v1225 = vunpack.c.l.b16 %v330
    %v1226 = vunpack.c.h.b16 %v330
    %v1227 = vunpack.c.l.b16 %v331
    %v1228 = vunpack.c.h.b16 %v331
    %v1229 = vunpack.c.l.b16 %v332
    %v1230 = vunpack.c.h.b16 %v332
    %v1231 = vunpack.c.l.b16 %v333
    %v1232 = vunpack.c.h.b16 %v333
    %v1233 = vunpack.c.l.b16 %v334
    %v1234 = vunpack.c.h.b16 %v334
    %v1235 = vunpack.c.l.b16 %v335
    %v1236 = vunpack.c.h.b16 %v335
    %v1237 = vunpack.c.l.b16 %v336
    %v1238 = vunpack.c.h.b16 %v336
    %v1239 = vunpack.c.l.b16 %v337
    %v1240 = vunpack.c.h.b16 %v337
    %v1241 = vunpack.c.l.b16 %v338
    %v1242 = vunpack.c.h.b16 %v338
    %v1243 = vunpack.c.l.b16 %v339
    %v1244 = vunpack.c.h.b16 %v339
    %v1245 = vunpack.c.l.b16 %v340
    %v1246 = vunpack.c.h.b16 %v340
    %v1247 = vunpack.c.l.b16 %v341
    %v1248 = vunpack.c.h.b16 %v341
    %v1249 = vunpack.c.l.b16 %v342
    %v1250 = vunpack.c.h.b16 %v342
    %v1251 = vunpack.c.l.b16 %v343
    %v1252 = vunpack.c.h.b16 %v343
    %v1253 = vunpack.c.l.b16 %v344
    %v1254 = vunpack.c.h.b16 %v344
    %v1255 = vpack.c.b16 %v747, %v743
    %v1256 = vpack.c.b16 %v748, %v744
    %v1257 = vpack.c.b16 %v749, %v745
    %v1258 = vpack.c.b16 %v750, %v746
    %v1259 = vpack.c.b16 %v755, %v751
    %v1260 = vpack.c.b16 %v756, %v752
    %v1261 = vpack.c.b16 %v757, %v753
    %v1262 = vpack.c.b16 %v758, %v754
    %v1263 = vpack.c.b16 %v763, %v759
    %v1264 = vpack.c.b16 %v764, %v760
    %v1265 = vpack.c.b16 %v765, %v761
    %v1266 = vpack.c.b16 %v766, %v762
    %v1267 = vpack.c.b16 %v771, %v767
    %v1268 = vpack.c.b16 %v772, %v768
    %v1269 = vpack.c.b16 %v773, %v769
    %v1270 = vpack.c.b16 %v774, %v770
    %v1271 = vpack.c.b16 %v779, %v775
    %v1272 = vpack.c.b16 %v780, %v776
    %v1273 = vpack.c.b16 %v781, %v777
    %v1274 = vpack.c.b16 %v782, %v778
    %v1275 = vpack.c.b16 %v787, %v783
    %v1276 = vpack.c.b16 %v788, %v784
    %v1277 = vpack.c.b16 %v789, %v785
    %v1278 = vpack.c.b16 %v790, %v786
    %v1279 = vpack.c.b16 %v795, %v791
    %v1280 = vpack.c.b16 %v796, %v792
    %v1281 = vpack.c.b16 %v797, %v793
    %v1282 = vpack.c.b16 %v798, %v794
    %v1283 = vpack.c.b16 %v803, %v799
    %v1284 = vpack.c.b16 %v804, %v800
    %v1285 = vpack.c.b16 %v805, %v801
    %v1286 = vpack.c.b16 %v806, %v802
    %v1287 = vpack.c.b16 %v811, %v807
    %v1288 = vpack.c.b16 %v812, %v808
    %v1289 = vpack.c.b16 %v813, %v809
    %v1290 = vpack.c.b16 %v814, %v810
    %v1291 = vpack.c.b16 %v819, %v815
    %v1292 = vpack.c.b16 %v820, %v816
    %v1293 = vpack.c.b16 %v821, %v817
    %v1294 = vpack.c.b16 %v822, %v818
    %v1295 = vpack.c.b16 %v827, %v823
    %v1296 = vpack.c.b16 %v828, %v824
    %v1297 = vpack.c.b16 %v829, %v825
    %v1298 = vpack.c.b16 %v830, %v826
    %v1299 = vpack.c.b16 %v835, %v831
    %v1300 = vpack.c.b16 %v836, %v832
    %v1301 = vpack.c.b16 %v837, %v833
    %v1302 = vpack.c.b16 %v838, %v834
    %v1303 = vpack.c.b16 %v843, %v839
    %v1304 = vpack.c.b16 %v844, %v840
    %v1305 = vpack.c.b16 %v845, %v841
    %v1306 = vpack.c.b16 %v846, %v842
    %v1307 = vpack.c.b16 %v851, %v847
    %v1308 = vpack.c.b16 %v852, %v848
    %v1309 = vpack.c.b16 %v853, %v849
    %v1310 = vpack.c.b16 %v854, %v850
    %v1311 = vpack.c.b16 %v859, %v855
    %v1312 = vpack.c.b16 %v860, %v856
    %v1313 = vpack.c.b16 %v861, %v857
    %v1314 = vpack.c.b16 %v862, %v858
    %v1315 = vpack.c.b16 %v867, %v863
    %v1316 = vpack.c.b16 %v868, %v864
    %v1317 = vpack.c.b16 %v869, %v865
    %v1318 = vpack.c.b16 %v870, %v866
    %v1319 = vpack.c.b16 %v875, %v871
    %v1320 = vpack.c.b16 %v876, %v872
    %v1321 = vpack.c.b16 %v877, %v873
    %v1322 = vpack.c.b16 %v878, %v874
    %v1323 = vpack.c.b16 %v883, %v879
    %v1324 = vpack.c.b16 %v884, %v880
    %v1325 = vpack.c.b16 %v885, %v881
    %v1326 = vpack.c.b16 %v886, %v882
    %v1327 = vpack.c.b16 %v891, %v887
    %v1328 = vpack.c.b16 %v892, %v888
    %v1329 = vpack.c.b16 %v893, %v889
    %v1330 = vpack.c.b16 %v894, %v890
    %v1331 = vpack.c.b16 %v899, %v895
    %v1332 = vpack.c.b16 %v900, %v896
    %v1333 = vpack.c.b16 %v901, %v897
    %v1334 = vpack.c.b16 %v902, %v898
    %v1335 = vpack.c.b16 %v907, %v903
    %v1336 = vpack.c.b16 %v908, %v904
    %v1337 = vpack.c.b16 %v909, %v905
    %v1338 = vpack.c.b16 %v910, %v906
    %v1339 = vpack.c.b16 %v915, %v911
    %v1340 = vpack.c.b16 %v916, %v912
    %v1341 = vpack.c.b16 %v917, %v913
    %v1342 = vpack.c.b16 %v918, %v914
    %v1343 = vpack.c.b16 %v923, %v919
    %v1344 = vpack.c.b16 %v924, %v920
    %v1345 = vpack.c.b16 %v925, %v921
    %v1346 = vpack.c.b16 %v926, %v922
    %v1347 = vpack.c.b16 %v931, %v927
    %v1348 = vpack.c.b16 %v932, %v928
    %v1349 = vpack.c.b16 %v933, %v929
    %v1350 = vpack.c.b16 %v934, %v930
    %v1351 = vpack.c.b16 %v939, %v935
    %v1352 = vpack.c.b16 %v940, %v936
    %v1353 = vpack.c.b16 %v941, %v937
    %v1354 = vpack.c.b16 %v942, %v938
    %v1355 = vpack.c.b16 %v947, %v943
    %v1356 = vpack.c.b16 %v948, %v944
    %v1357 = vpack.c.b16 %v949, %v945
    %v1358 = vpack.c.b16 %v950, %v946
    %v1359 = vpack.c.b16 %v955, %v951
    %v1360 = vpack.c.b16 %v956, %v952
    %v1361 = vpack.c.b16 %v957, %v953
    %v1362 = vpack.c.b16 %v958, %v954
    %v1363 = vpack.c.b16 %v963, %v959
    %v1364 = vpack.c.b16 %v964, %v960
    %v1365 = vpack.c.b16 %v965, %v961
    %v1366 = vpack.c.b16 %v966, %v962
    %v1367 = vpack.c.b16 %v971, %v967
    %v1368 = vpack.c.b16 %v972, %v968
    %v1369 = vpack.c.b16 %v973, %v969
    %v1370 = vpack.c.b16 %v974, %v970
    %v1371 = vpack.c.b16 %v979, %v975
    %v1372 = vpack.c.b16 %v980, %v976
    %v1373 = vpack.c.b16 %v981, %v977
    %v1374 = vpack.c.b16 %v982, %v978
    %v1375 = vpack.c.b16 %v987, %v983
    %v1376 = vpack.c.b16 %v988, %v984
    %v1377 = vpack.c.b16 %v989, %v985
    %v1378 = vpack.c.b16 %v990, %v986
    %v1379 = vpack.c.b16 %v995, %v991
    %v1380 = vpack.c.b16 %v996, %v992
    %v1381 = vpack.c.b16 %v997, %v993
    %v1382 = vpack.c.b16 %v998, %v994
    %v1383 = vpack.c.b16 %v1003, %v999
    %v1384 = vpack.c.b16 %v1004, %v1000
    %v1385 = vpack.c.b16 %v1005, %v1001
    %v1386 = vpack.c.b16 %v1006, %v1002
    %v1387 = vpack.c.b16 %v1011, %v1007
    %v1388 = vpack.c.b16 %v1012, %v1008
    %v1389 = vpack.c.b16 %v1013, %v1009
    %v1390 = vpack.c.b16 %v1014, %v1010
    %v1391 = vpack.c.b16 %v1019, %v1015
    %v1392 = vpack.c.b16 %v1020, %v1016
    %v1393 = vpack.c.b16 %v1021, %v1017
    %v1394 = vpack.c.b16 %v1022, %v1018
    %v1395 = vpack.c.b16 %v1027, %v1023
    %v1396 = vpack.c.b16 %v1028, %v1024
    %v1397 = vpack.c.b16 %v1029, %v1025
    %v1398 = vpack.c.b16 %v1030, %v1026
    %v1399 = vpack.c.b16 %v1035, %v1031
    %v1400 = vpack.c.b16 %v1036, %v1032
    %v1401 = vpack.c.b16 %v1037, %v1033
    %v1402 = vpack.c.b16 %v1038, %v1034
    %v1403 = vpack.c.b16 %v1043, %v1039
    %v1404 = vpack.c.b16 %v1044, %v1040
    %v1405 = vpack.c.b16 %v1045, %v1041
    %v1406 = vpack.c.b16 %v1046, %v1042
    %v1407 = vpack.c.b16 %v1051, %v1047
    %v1408 = vpack.c.b16 %v1052, %v1048
    %v1409 = vpack.c.b16 %v1053, %v1049
    %v1410 = vpack.c.b16 %v1054, %v1050
    %v1411 = vpack.c.b16 %v1059, %v1055
    %v1412 = vpack.c.b16 %v1060, %v1056
    %v1413 = vpack.c.b16 %v1061, %v1057
    %v1414 = vpack.c.b16 %v1062, %v1058
    %v1415 = vpack.c.b16 %v1067, %v1063
    %v1416 = vpack.c.b16 %v1068, %v1064
    %v1417 = vpack.c.b16 %v1069, %v1065
    %v1418 = vpack.c.b16 %v1070, %v1066
    %v1419 = vpack.c.b16 %v1075, %v1071
    %v1420 = vpack.c.b16 %v1076, %v1072
    %v1421 = vpack.c.b16 %v1077, %v1073
    %v1422 = vpack.c.b16 %v1078, %v1074
    %v1423 = vpack.c.b16 %v1083, %v1079
    %v1424 = vpack.c.b16 %v1084, %v1080
    %v1425 = vpack.c.b16 %v1085, %v1081
    %v1426 = vpack.c.b16 %v1086, %v1082
    %v1427 = vpack.c.b16 %v1091, %v1087
    %v1428 = vpack.c.b16 %v1092, %v1088
    %v1429 = vpack.c.b16 %v1093, %v1089
    %v1430 = vpack.c.b16 %v1094, %v1090
    %v1431 = vpack.c.b16 %v1099, %v1095
    %v1432 = vpack.c.b16 %v1100, %v1096
    %v1433 = vpack.c.b16 %v1101, %v1097
    %v1434 = vpack.c.b16 %v1102, %v1098
    %v1435 = vpack.c.b16 %v1107, %v1103
    %v1436 = vpack.c.b16 %v1108, %v1104
    %v1437 = vpack.c.b16 %v1109, %v1105
    %v1438 = vpack.c.b16 %v1110, %v1106
    %v1439 = vpack.c.b16 %v1115, %v1111
    %v1440 = vpack.c.b16 %v1116, %v1112
    %v1441 = vpack.c.b16 %v1117, %v1113
    %v1442 = vpack.c.b16 %v1118, %v1114
    %v1443 = vpack.c.b16 %v1123, %v1119
    %v1444 = vpack.c.b16 %v1124, %v1120
    %v1445 = vpack.c.b16 %v1125, %v1121
    %v1446 = vpack.c.b16 %v1126, %v1122
    %v1447 = vpack.c.b16 %v1131, %v1127
    %v1448 = vpack.c.b16 %v1132, %v1128
    %v1449 = vpack.c.b16 %v1133, %v1129
    %v1450 = vpack.c.b16 %v1134, %v1130
    %v1451 = vpack.c.b16 %v1139, %v1135
    %v1452 = vpack.c.b16 %v1140, %v1136
    %v1453 = vpack.c.b16 %v1141, %v1137
    %v1454 = vpack.c.b16 %v1142, %v1138
    %v1455 = vpack.c.b16 %v1147, %v1143
    %v1456 = vpack.c.b16 %v1148, %v1144
    %v1457 = vpack.c.b16 %v1149, %v1145
    %v1458 = vpack.c.b16 %v1150, %v1146
    %v1459 = vpack.c.b16 %v1155, %v1151
    %v1460 = vpack.c.b16 %v1156, %v1152
    %v1461 = vpack.c.b16 %v1157, %v1153
    %v1462 = vpack.c.b16 %v1158, %v1154
    %v1463 = vpack.c.b16 %v1163, %v1159
    %v1464 = vpack.c.b16 %v1164, %v1160
    %v1465 = vpack.c.b16 %v1165, %v1161
    %v1466 = vpack.c.b16 %v1166, %v1162
    %v1467 = vpack.c.b16 %v1171, %v1167
    %v1468 = vpack.c.b16 %v1172, %v1168
    %v1469 = vpack.c.b16 %v1173, %v1169
    %v1470 = vpack.c.b16 %v1174, %v1170
    %v1471 = vpack.c.b16 %v1179, %v1175
    %v1472 = vpack.c.b16 %v1180, %v1176
    %v1473 = vpack.c.b16 %v1181, %v1177
    %v1474 = vpack.c.b16 %v1182, %v1178
    %v1475 = vpack.c.b16 %v1187, %v1183
    %v1476 = vpack.c.b16 %v1188, %v1184
    %v1477 = vpack.c.b16 %v1189, %v1185
    %v1478 = vpack.c.b16 %v1190, %v1186
    %v1479 = vpack.c.b16 %v1195, %v1191
    %v1480 = vpack.c.b16 %v1196, %v1192
    %v1481 = vpack.c.b16 %v1197, %v1193
    %v1482 = vpack.c.b16 %v1198, %v1194
    %v1483 = vpack.c.b16 %v1203, %v1199
    %v1484 = vpack.c.b16 %v1204, %v1200
    %v1485 = vpack.c.b16 %v1205, %v1201
    %v1486 = vpack.c.b16 %v1206, %v1202
    %v1487 = vpack.c.b16 %v1211, %v1207
    %v1488 = vpack.c.b16 %v1212, %v1208
    %v1489 = vpack.c.b16 %v1213, %v1209
    %v1490 = vpack.c.b16 %v1214, %v1210
    %v1491 = vpack.c.b16 %v1219, %v1215
    %v1492 = vpack.c.b16 %v1220, %v1216
    %v1493 = vpack.c.b16 %v1221, %v1217
    %v1494 = vpack.c.b16 %v1222, %v1218
    %v1495 = vpack.c.b16 %v1227, %v1223
    %v1496 = vpack.c.b16 %v1228, %v1224
    %v1497 = vpack.c.b16 %v1229, %v1225
    %v1498 = vpack.c.b16 %v1230, %v1226
    %v1499 = vpack.c.b16 %v1235, %v1231
    %v1500 = vpack.c.b16 %v1236, %v1232
    %v1501 = vpack.c.b16 %v1237, %v1233
    %v1502 = vpack.c.b16 %v1238, %v1234
    %v1503 = vpack.c.b16 %v1243, %v1239
    %v1504 = vpack.c.b16 %v1244, %v1240
    %v1505 = vpack.c.b16 %v1245, %v1241
    %v1506 = vpack.c.b16 %v1246, %v1242
    %v1507 = vpack.c.b16 %v1251, %v1247
    %v1508 = vpack.c.b16 %v1252, %v1248
    %v1509 = vpack.c.b16 %v1253, %v1249
    %v1510 = vpack.c.b16 %v1254, %v1250
    %1767 = vmatprep.subr.bf16.mxu0 %v1256
    %1768 = vmatpush1.bf16.msra.mxu0 %v1255
    %1769 = vmatprep.subr.bf16.mxu0 %v1260
    %1770 = vmatpush1.bf16.msra.mxu0 %v1259
    %1771 = vmatprep.subr.bf16.mxu0 %v1264
    %1772 = vmatpush1.bf16.msra.mxu0 %v1263
    %1773 = vmatprep.subr.bf16.mxu0 %v1268
    %1774 = vmatpush1.bf16.msra.mxu0 %v1267
    %1775 = vmatprep.subr.bf16.mxu0 %v1272
    %1776 = vmatpush1.bf16.msra.mxu0 %v1271
    %1777 = vmatprep.subr.bf16.mxu0 %v1276
    %1778 = vmatpush1.bf16.msra.mxu0 %v1275
    %1779 = vmatprep.subr.bf16.mxu0 %v1280
    %1780 = vmatpush1.bf16.msra.mxu0 %v1279
    %1781 = vmatprep.subr.bf16.mxu0 %v1284
    %1782 = vmatpush1.bf16.msra.mxu0 %v1283
    %1783 = vmatprep.subr.bf16.mxu0 %v1288
    %1784 = vmatpush1.bf16.msra.mxu0 %v1287
    %1785 = vmatprep.subr.bf16.mxu0 %v1292
    %1786 = vmatpush1.bf16.msra.mxu0 %v1291
    %1787 = vmatprep.subr.bf16.mxu0 %v1296
    %1788 = vmatpush1.bf16.msra.mxu0 %v1295
    %1789 = vmatprep.subr.bf16.mxu0 %v1300
    %1790 = vmatpush1.bf16.msra.mxu0 %v1299
    %1791 = vmatprep.subr.bf16.mxu0 %v1304
    %1792 = vmatpush1.bf16.msra.mxu0 %v1303
    %1793 = vmatprep.subr.bf16.mxu0 %v1308
    %1794 = vmatpush1.bf16.msra.mxu0 %v1307
    %1795 = vmatprep.subr.bf16.mxu0 %v1312
    %1796 = vmatpush1.bf16.msra.mxu0 %v1311
    %1797 = vmatprep.subr.bf16.mxu0 %v1316
    %1798 = vmatpush1.bf16.msra.mxu0 %v1315
    %1799 = vmatprep.mubr.bf16.mxu0 %v440
    %1800 = vmatmul.mubr.bf16.gmra.mrb[0].mxu0 %v439
    %v1801 = vpop.f32.mrb[0].mxu0
    %v1802 = vadd.f32 %v350, %v1801
    %v1803 = vpop.f32.mrb[0].mxu0
    %v1804 = vadd.f32 %v354, %v1803
    %v1805 = vpop.f32.mrb[0].mxu0
    %v1806 = vadd.f32 %v350, %v1805
    %v1807 = vpop.f32.mrb[0].mxu0
    %v1808 = vadd.f32 %v354, %v1807
    %1809 = vmatprep.mubr.bf16.mxu0 %v448
    %1810 = vmatmul.mubr.bf16.gmra.mrb[0].mxu0 %v447
    %v1811 = vpop.f32.mrb[0].mxu0
    %v1812 = vadd.f32 %v350, %v1811
    %v1813 = vpop.f32.mrb[0].mxu0
    %v1814 = vadd.f32 %v354, %v1813
    %v1815 = vpop.f32.mrb[0].mxu0
    %v1816 = vadd.f32 %v350, %v1815
    %v1817 = vpop.f32.mrb[0].mxu0
    %v1818 = vadd.f32 %v354, %v1817
    %1819 = vmatprep.mubr.bf16.mxu0 %v456
    %1820 = vmatmul.mubr.bf16.gmra.mrb[0].mxu0 %v455
    %v1821 = vpop.f32.mrb[0].mxu0
    %v1822 = vadd.f32 %v350, %v1821
    %v1823 = vpop.f32.mrb[0].mxu0
    %v1824 = vadd.f32 %v354, %v1823
    %v1825 = vpop.f32.mrb[0].mxu0
    %v1826 = vadd.f32 %v350, %v1825
    %v1827 = vpop.f32.mrb[0].mxu0
    %v1828 = vadd.f32 %v354, %v1827
    %1829 = vdwg.mxu0
    %1830 = vmatprep.subr.bf16.mxu0 %v1320
    %1831 = vmatpush1.bf16.msra.mxu0 %v1319
    %1832 = vmatprep.subr.bf16.mxu0 %v1324
    %1833 = vmatpush1.bf16.msra.mxu0 %v1323
    %1834 = vmatprep.subr.bf16.mxu0 %v1328
    %1835 = vmatpush1.bf16.msra.mxu0 %v1327
    %1836 = vmatprep.subr.bf16.mxu0 %v1332
    %1837 = vmatpush1.bf16.msra.mxu0 %v1331
    %1838 = vmatprep.subr.bf16.mxu0 %v1336
    %1839 = vmatpush1.bf16.msra.mxu0 %v1335
    %1840 = vmatprep.subr.bf16.mxu0 %v1340
    %1841 = vmatpush1.bf16.msra.mxu0 %v1339
    %1842 = vmatprep.subr.bf16.mxu0 %v1344
    %1843 = vmatpush1.bf16.msra.mxu0 %v1343
    %1844 = vmatprep.subr.bf16.mxu0 %v1348
    %1845 = vmatpush1.bf16.msra.mxu0 %v1347
    %1846 = vmatprep.subr.bf16.mxu0 %v1352
    %1847 = vmatpush1.bf16.msra.mxu0 %v1351
    %1848 = vmatprep.subr.bf16.mxu0 %v1356
    %1849 = vmatpush1.bf16.msra.mxu0 %v1355
    %1850 = vmatprep.subr.bf16.mxu0 %v1360
    %1851 = vmatpush1.bf16.msra.mxu0 %v1359
    %1852 = vmatprep.subr.bf16.mxu0 %v1364
    %1853 = vmatpush1.bf16.msra.mxu0 %v1363
    %1854 = vmatprep.subr.bf16.mxu0 %v1368
    %1855 = vmatpush1.bf16.msra.mxu0 %v1367
    %1856 = vmatprep.subr.bf16.mxu0 %v1372
    %1857 = vmatpush1.bf16.msra.mxu0 %v1371
    %1858 = vmatprep.subr.bf16.mxu0 %v1376
    %1859 = vmatpush1.bf16.msra.mxu0 %v1375
    %1860 = vmatprep.subr.bf16.mxu0 %v1380
    %1861 = vmatpush1.bf16.msra.mxu0 %v1379
    %1862 = vmatprep.mubr.bf16.mxu0 %v442
    %1863 = vmatmul.mubr.bf16.gmra.mrb[0].mxu0 %v441
    %v1864 = vpop.f32.mrb[0].mxu0
    %v1865 = vadd.f32 %v1802, %v1864
    %v1866 = vpop.f32.mrb[0].mxu0
    %v1867 = vadd.f32 %v1804, %v1866
    %v1868 = vpop.f32.mrb[0].mxu0
    %v1869 = vadd.f32 %v1806, %v1868
    %v1870 = vpop.f32.mrb[0].mxu0
    %v1871 = vadd.f32 %v1808, %v1870
    %1872 = vmatprep.mubr.bf16.mxu0 %v450
    %1873 = vmatmul.mubr.bf16.gmra.mrb[0].mxu0 %v449
    %v1874 = vpop.f32.mrb[0].mxu0
    %v1875 = vadd.f32 %v1812, %v1874
    %v1876 = vpop.f32.mrb[0].mxu0
    %v1877 = vadd.f32 %v1814, %v1876
    %v1878 = vpop.f32.mrb[0].mxu0
    %v1879 = vadd.f32 %v1816, %v1878
    %v1880 = vpop.f32.mrb[0].mxu0
    %v1881 = vadd.f32 %v1818, %v1880
    %1882 = vmatprep.mubr.bf16.mxu0 %v458
    %1883 = vmatmul.mubr.bf16.gmra.mrb[0].mxu0 %v457
    %v1884 = vpop.f32.mrb[0].mxu0
    %v1885 = vadd.f32 %v1822, %v1884
    %v1886 = vpop.f32.mrb[0].mxu0
    %v1887 = vadd.f32 %v1824, %v1886
    %v1888 = vpop.f32.mrb[0].mxu0
    %v1889 = vadd.f32 %v1826, %v1888
    %v1890 = vpop.f32.mrb[0].mxu0
    %v1891 = vadd.f32 %v1828, %v1890
    %1892 = vdwg.mxu0
    %1893 = vmatprep.subr.bf16.mxu0 %v1384
    %1894 = vmatpush1.bf16.msra.mxu0 %v1383
    %1895 = vmatprep.subr.bf16.mxu0 %v1388
    %1896 = vmatpush1.bf16.msra.mxu0 %v1387
    %1897 = vmatprep.subr.bf16.mxu0 %v1392
    %1898 = vmatpush1.bf16.msra.mxu0 %v1391
    %1899 = vmatprep.subr.bf16.mxu0 %v1396
    %1900 = vmatpush1.bf16.msra.mxu0 %v1395
    %1901 = vmatprep.subr.bf16.mxu0 %v1400
    %1902 = vmatpush1.bf16.msra.mxu0 %v1399
    %1903 = vmatprep.subr.bf16.mxu0 %v1404
    %1904 = vmatpush1.bf16.msra.mxu0 %v1403
    %1905 = vmatprep.subr.bf16.mxu0 %v1408
    %1906 = vmatpush1.bf16.msra.mxu0 %v1407
    %1907 = vmatprep.subr.bf16.mxu0 %v1412
    %1908 = vmatpush1.bf16.msra.mxu0 %v1411
    %1909 = vmatprep.subr.bf16.mxu0 %v1416
    %1910 = vmatpush1.bf16.msra.mxu0 %v1415
    %1911 = vmatprep.subr.bf16.mxu0 %v1420
    %1912 = vmatpush1.bf16.msra.mxu0 %v1419
    %1913 = vmatprep.subr.bf16.mxu0 %v1424
    %1914 = vmatpush1.bf16.msra.mxu0 %v1423
    %1915 = vmatprep.subr.bf16.mxu0 %v1428
    %1916 = vmatpush1.bf16.msra.mxu0 %v1427
    %1917 = vmatprep.subr.bf16.mxu0 %v1432
    %1918 = vmatpush1.bf16.msra.mxu0 %v1431
    %1919 = vmatprep.subr.bf16.mxu0 %v1436
    %1920 = vmatpush1.bf16.msra.mxu0 %v1435
    %1921 = vmatprep.subr.bf16.mxu0 %v1440
    %1922 = vmatpush1.bf16.msra.mxu0 %v1439
    %1923 = vmatprep.subr.bf16.mxu0 %v1444
    %1924 = vmatpush1.bf16.msra.mxu0 %v1443
    %1925 = vmatprep.mubr.bf16.mxu0 %v444
    %1926 = vmatmul.mubr.bf16.gmra.mrb[0].mxu0 %v443
    %v1927 = vpop.f32.mrb[0].mxu0
    %v1928 = vadd.f32 %v1865, %v1927
    %v1929 = vpop.f32.mrb[0].mxu0
    %v1930 = vadd.f32 %v1867, %v1929
    %v1931 = vpop.f32.mrb[0].mxu0
    %v1932 = vadd.f32 %v1869, %v1931
    %v1933 = vpop.f32.mrb[0].mxu0
    %v1934 = vadd.f32 %v1871, %v1933
    %1935 = vmatprep.mubr.bf16.mxu0 %v452
    %1936 = vmatmul.mubr.bf16.gmra.mrb[0].mxu0 %v451
    %v1937 = vpop.f32.mrb[0].mxu0
    %v1938 = vadd.f32 %v1875, %v1937
    %v1939 = vpop.f32.mrb[0].mxu0
    %v1940 = vadd.f32 %v1877, %v1939
    %v1941 = vpop.f32.mrb[0].mxu0
    %v1942 = vadd.f32 %v1879, %v1941
    %v1943 = vpop.f32.mrb[0].mxu0
    %v1944 = vadd.f32 %v1881, %v1943
    %1945 = vmatprep.mubr.bf16.mxu0 %v460
    %1946 = vmatmul.mubr.bf16.gmra.mrb[0].mxu0 %v459
    %v1947 = vpop.f32.mrb[0].mxu0
    %v1948 = vadd.f32 %v1885, %v1947
    %v1949 = vpop.f32.mrb[0].mxu0
    %v1950 = vadd.f32 %v1887, %v1949
    %v1951 = vpop.f32.mrb[0].mxu0
    %v1952 = vadd.f32 %v1889, %v1951
    %v1953 = vpop.f32.mrb[0].mxu0
    %v1954 = vadd.f32 %v1891, %v1953
    %1955 = vdwg.mxu0
    %1956 = vmatprep.subr.bf16.mxu0 %v1448
    %1957 = vmatpush1.bf16.msra.mxu0 %v1447
    %1958 = vmatprep.subr.bf16.mxu0 %v1452
    %1959 = vmatpush1.bf16.msra.mxu0 %v1451
    %1960 = vmatprep.subr.bf16.mxu0 %v1456
    %1961 = vmatpush1.bf16.msra.mxu0 %v1455
    %1962 = vmatprep.subr.bf16.mxu0 %v1460
    %1963 = vmatpush1.bf16.msra.mxu0 %v1459
    %1964 = vmatprep.subr.bf16.mxu0 %v1464
    %1965 = vmatpush1.bf16.msra.mxu0 %v1463
    %1966 = vmatprep.subr.bf16.mxu0 %v1468
    %1967 = vmatpush1.bf16.msra.mxu0 %v1467
    %1968 = vmatprep.subr.bf16.mxu0 %v1472
    %1969 = vmatpush1.bf16.msra.mxu0 %v1471
    %1970 = vmatprep.subr.bf16.mxu0 %v1476
    %1971 = vmatpush1.bf16.msra.mxu0 %v1475
    %1972 = vmatprep.subr.bf16.mxu0 %v1480
    %1973 = vmatpush1.bf16.msra.mxu0 %v1479
    %1974 = vmatprep.subr.bf16.mxu0 %v1484
    %1975 = vmatpush1.bf16.msra.mxu0 %v1483
    %1976 = vmatprep.subr.bf16.mxu0 %v1488
    %1977 = vmatpush1.bf16.msra.mxu0 %v1487
    %1978 = vmatprep.subr.bf16.mxu0 %v1492
    %1979 = vmatpush1.bf16.msra.mxu0 %v1491
    %1980 = vmatprep.subr.bf16.mxu0 %v1496
    %1981 = vmatpush1.bf16.msra.mxu0 %v1495
    %1982 = vmatprep.subr.bf16.mxu0 %v1500
    %1983 = vmatpush1.bf16.msra.mxu0 %v1499
    %1984 = vmatprep.subr.bf16.mxu0 %v1504
    %1985 = vmatpush1.bf16.msra.mxu0 %v1503
    %1986 = vmatprep.subr.bf16.mxu0 %v1508
    %1987 = vmatpush1.bf16.msra.mxu0 %v1507
    %1988 = vmatprep.mubr.bf16.mxu0 %v446
    %1989 = vmatmul.mubr.bf16.gmra.mrb[0].mxu0 %v445
    %v1990 = vpop.f32.mrb[0].mxu0
    %v1991 = vadd.f32 %v1928, %v1990
    %v1992 = vpop.f32.mrb[0].mxu0
    %v1993 = vadd.f32 %v1930, %v1992
    %v1994 = vpop.f32.mrb[0].mxu0
    %v1995 = vadd.f32 %v1932, %v1994
    %v1996 = vpop.f32.mrb[0].mxu0
    %v1997 = vadd.f32 %v1934, %v1996
    %1998 = vmatprep.mubr.bf16.mxu0 %v454
    %1999 = vmatmul.mubr.bf16.gmra.mrb[0].mxu0 %v453
    %v2000 = vpop.f32.mrb[0].mxu0
    %v2001 = vadd.f32 %v1938, %v2000
    %v2002 = vpop.f32.mrb[0].mxu0
    %v2003 = vadd.f32 %v1940, %v2002
    %v2004 = vpop.f32.mrb[0].mxu0
    %v2005 = vadd.f32 %v1942, %v2004
    %v2006 = vpop.f32.mrb[0].mxu0
    %v2007 = vadd.f32 %v1944, %v2006
    %2008 = vmatprep.mubr.bf16.mxu0 %v462
    %2009 = vmatmul.mubr.bf16.gmra.mrb[0].mxu0 %v461
    %v2010 = vpop.f32.mrb[0].mxu0
    %v2011 = vadd.f32 %v1948, %v2010
    %v2012 = vpop.f32.mrb[0].mxu0
    %v2013 = vadd.f32 %v1950, %v2012
    %v2014 = vpop.f32.mrb[0].mxu0
    %v2015 = vadd.f32 %v1952, %v2014
    %v2016 = vpop.f32.mrb[0].mxu0
    %v2017 = vadd.f32 %v1954, %v2016
    %2018 = vdwg.mxu0
    %2019 = vmatprep.subr.bf16.mxu0 %v1258
    %2020 = vmatpush1.bf16.msra.mxu0 %v1257
    %2021 = vmatprep.subr.bf16.mxu0 %v1262
    %2022 = vmatpush1.bf16.msra.mxu0 %v1261
    %2023 = vmatprep.subr.bf16.mxu0 %v1266
    %2024 = vmatpush1.bf16.msra.mxu0 %v1265
    %2025 = vmatprep.subr.bf16.mxu0 %v1270
    %2026 = vmatpush1.bf16.msra.mxu0 %v1269
    %2027 = vmatprep.subr.bf16.mxu0 %v1274
    %2028 = vmatpush1.bf16.msra.mxu0 %v1273
    %2029 = vmatprep.subr.bf16.mxu0 %v1278
    %2030 = vmatpush1.bf16.msra.mxu0 %v1277
    %2031 = vmatprep.subr.bf16.mxu0 %v1282
    %2032 = vmatpush1.bf16.msra.mxu0 %v1281
    %2033 = vmatprep.subr.bf16.mxu0 %v1286
    %2034 = vmatpush1.bf16.msra.mxu0 %v1285
    %2035 = vmatprep.subr.bf16.mxu0 %v1290
    %2036 = vmatpush1.bf16.msra.mxu0 %v1289
    %2037 = vmatprep.subr.bf16.mxu0 %v1294
    %2038 = vmatpush1.bf16.msra.mxu0 %v1293
    %2039 = vmatprep.subr.bf16.mxu0 %v1298
    %2040 = vmatpush1.bf16.msra.mxu0 %v1297
    %2041 = vmatprep.subr.bf16.mxu0 %v1302
    %2042 = vmatpush1.bf16.msra.mxu0 %v1301
    %2043 = vmatprep.subr.bf16.mxu0 %v1306
    %2044 = vmatpush1.bf16.msra.mxu0 %v1305
    %2045 = vmatprep.subr.bf16.mxu0 %v1310
    %2046 = vmatpush1.bf16.msra.mxu0 %v1309
    %2047 = vmatprep.subr.bf16.mxu0 %v1314
    %2048 = vmatpush1.bf16.msra.mxu0 %v1313
    %2049 = vmatprep.subr.bf16.mxu0 %v1318
    %2050 = vmatpush1.bf16.msra.mxu0 %v1317
    %2051 = vmatprep.mubr.bf16.mxu0 %v440
    %2052 = vmatmul.mubr.bf16.gmra.mrb[0].mxu0 %v439
    %v2053 = vpop.f32.mrb[0].mxu0
    %v2054 = vadd.f32 %v358, %v2053
    %v2055 = vpop.f32.mrb[0].mxu0
    %v2056 = vadd.f32 %v362, %v2055
    %v2057 = vpop.f32.mrb[0].mxu0
    %v2058 = vadd.f32 %v358, %v2057
    %v2059 = vpop.f32.mrb[0].mxu0
    %v2060 = vadd.f32 %v362, %v2059
    %2061 = vmatprep.mubr.bf16.mxu0 %v448
    %2062 = vmatmul.mubr.bf16.gmra.mrb[0].mxu0 %v447
    %v2063 = vpop.f32.mrb[0].mxu0
    %v2064 = vadd.f32 %v358, %v2063
    %v2065 = vpop.f32.mrb[0].mxu0
    %v2066 = vadd.f32 %v362, %v2065
    %v2067 = vpop.f32.mrb[0].mxu0
    %v2068 = vadd.f32 %v358, %v2067
    %v2069 = vpop.f32.mrb[0].mxu0
    %v2070 = vadd.f32 %v362, %v2069
    %2071 = vmatprep.mubr.bf16.mxu0 %v456
    %2072 = vmatmul.mubr.bf16.gmra.mrb[0].mxu0 %v455
    %v2073 = vpop.f32.mrb[0].mxu0
    %v2074 = vadd.f32 %v358, %v2073
    %v2075 = vpop.f32.mrb[0].mxu0
    %v2076 = vadd.f32 %v362, %v2075
    %v2077 = vpop.f32.mrb[0].mxu0
    %v2078 = vadd.f32 %v358, %v2077
    %v2079 = vpop.f32.mrb[0].mxu0
    %v2080 = vadd.f32 %v362, %v2079
    %2081 = vdwg.mxu0
    %2082 = vmatprep.subr.bf16.mxu0 %v1322
    %2083 = vmatpush1.bf16.msra.mxu0 %v1321
    %2084 = vmatprep.subr.bf16.mxu0 %v1326
    %2085 = vmatpush1.bf16.msra.mxu0 %v1325
    %2086 = vmatprep.subr.bf16.mxu0 %v1330
    %2087 = vmatpush1.bf16.msra.mxu0 %v1329
    %2088 = vmatprep.subr.bf16.mxu0 %v1334
    %2089 = vmatpush1.bf16.msra.mxu0 %v1333
    %2090 = vmatprep.subr.bf16.mxu0 %v1338
    %2091 = vmatpush1.bf16.msra.mxu0 %v1337
    %2092 = vmatprep.subr.bf16.mxu0 %v1342
    %2093 = vmatpush1.bf16.msra.mxu0 %v1341
    %2094 = vmatprep.subr.bf16.mxu0 %v1346
    %2095 = vmatpush1.bf16.msra.mxu0 %v1345
    %2096 = vmatprep.subr.bf16.mxu0 %v1350
    %2097 = vmatpush1.bf16.msra.mxu0 %v1349
    %2098 = vmatprep.subr.bf16.mxu0 %v1354
    %2099 = vmatpush1.bf16.msra.mxu0 %v1353
    %2100 = vmatprep.subr.bf16.mxu0 %v1358
    %2101 = vmatpush1.bf16.msra.mxu0 %v1357
    %2102 = vmatprep.subr.bf16.mxu0 %v1362
    %2103 = vmatpush1.bf16.msra.mxu0 %v1361
    %2104 = vmatprep.subr.bf16.mxu0 %v1366
    %2105 = vmatpush1.bf16.msra.mxu0 %v1365
    %2106 = vmatprep.subr.bf16.mxu0 %v1370
    %2107 = vmatpush1.bf16.msra.mxu0 %v1369
    %2108 = vmatprep.subr.bf16.mxu0 %v1374
    %2109 = vmatpush1.bf16.msra.mxu0 %v1373
    %2110 = vmatprep.subr.bf16.mxu0 %v1378
    %2111 = vmatpush1.bf16.msra.mxu0 %v1377
    %2112 = vmatprep.subr.bf16.mxu0 %v1382
    %2113 = vmatpush1.bf16.msra.mxu0 %v1381
    %2114 = vmatprep.mubr.bf16.mxu0 %v442
    %2115 = vmatmul.mubr.bf16.gmra.mrb[0].mxu0 %v441
    %v2116 = vpop.f32.mrb[0].mxu0
    %v2117 = vadd.f32 %v2054, %v2116
    %v2118 = vpop.f32.mrb[0].mxu0
    %v2119 = vadd.f32 %v2056, %v2118
    %v2120 = vpop.f32.mrb[0].mxu0
    %v2121 = vadd.f32 %v2058, %v2120
    %v2122 = vpop.f32.mrb[0].mxu0
    %v2123 = vadd.f32 %v2060, %v2122
    %2124 = vmatprep.mubr.bf16.mxu0 %v450
    %2125 = vmatmul.mubr.bf16.gmra.mrb[0].mxu0 %v449
    %v2126 = vpop.f32.mrb[0].mxu0
    %v2127 = vadd.f32 %v2064, %v2126
    %v2128 = vpop.f32.mrb[0].mxu0
    %v2129 = vadd.f32 %v2066, %v2128
    %v2130 = vpop.f32.mrb[0].mxu0
    %v2131 = vadd.f32 %v2068, %v2130
    %v2132 = vpop.f32.mrb[0].mxu0
    %v2133 = vadd.f32 %v2070, %v2132
    %2134 = vmatprep.mubr.bf16.mxu0 %v458
    %2135 = vmatmul.mubr.bf16.gmra.mrb[0].mxu0 %v457
    %v2136 = vpop.f32.mrb[0].mxu0
    %v2137 = vadd.f32 %v2074, %v2136
    %v2138 = vpop.f32.mrb[0].mxu0
    %v2139 = vadd.f32 %v2076, %v2138
    %v2140 = vpop.f32.mrb[0].mxu0
    %v2141 = vadd.f32 %v2078, %v2140
    %v2142 = vpop.f32.mrb[0].mxu0
    %v2143 = vadd.f32 %v2080, %v2142
    %2144 = vdwg.mxu0
    %2145 = vmatprep.subr.bf16.mxu0 %v1386
    %2146 = vmatpush1.bf16.msra.mxu0 %v1385
    %2147 = vmatprep.subr.bf16.mxu0 %v1390
    %2148 = vmatpush1.bf16.msra.mxu0 %v1389
    %2149 = vmatprep.subr.bf16.mxu0 %v1394
    %2150 = vmatpush1.bf16.msra.mxu0 %v1393
    %2151 = vmatprep.subr.bf16.mxu0 %v1398
    %2152 = vmatpush1.bf16.msra.mxu0 %v1397
    %2153 = vmatprep.subr.bf16.mxu0 %v1402
    %2154 = vmatpush1.bf16.msra.mxu0 %v1401
    %2155 = vmatprep.subr.bf16.mxu0 %v1406
    %2156 = vmatpush1.bf16.msra.mxu0 %v1405
    %2157 = vmatprep.subr.bf16.mxu0 %v1410
    %2158 = vmatpush1.bf16.msra.mxu0 %v1409
    %2159 = vmatprep.subr.bf16.mxu0 %v1414
    %2160 = vmatpush1.bf16.msra.mxu0 %v1413
    %2161 = vmatprep.subr.bf16.mxu0 %v1418
    %2162 = vmatpush1.bf16.msra.mxu0 %v1417
    %2163 = vmatprep.subr.bf16.mxu0 %v1422
    %2164 = vmatpush1.bf16.msra.mxu0 %v1421
    %2165 = vmatprep.subr.bf16.mxu0 %v1426
    %2166 = vmatpush1.bf16.msra.mxu0 %v1425
    %2167 = vmatprep.subr.bf16.mxu0 %v1430
    %2168 = vmatpush1.bf16.msra.mxu0 %v1429
    %2169 = vmatprep.subr.bf16.mxu0 %v1434
    %2170 = vmatpush1.bf16.msra.mxu0 %v1433
    %2171 = vmatprep.subr.bf16.mxu0 %v1438
    %2172 = vmatpush1.bf16.msra.mxu0 %v1437
    %2173 = vmatprep.subr.bf16.mxu0 %v1442
    %2174 = vmatpush1.bf16.msra.mxu0 %v1441
    %2175 = vmatprep.subr.bf16.mxu0 %v1446
    %2176 = vmatpush1.bf16.msra.mxu0 %v1445
    %2177 = vmatprep.mubr.bf16.mxu0 %v444
    %2178 = vmatmul.mubr.bf16.gmra.mrb[0].mxu0 %v443
    %v2179 = vpop.f32.mrb[0].mxu0
    %v2180 = vadd.f32 %v2117, %v2179
    %v2181 = vpop.f32.mrb[0].mxu0
    %v2182 = vadd.f32 %v2119, %v2181
    %v2183 = vpop.f32.mrb[0].mxu0
    %v2184 = vadd.f32 %v2121, %v2183
    %v2185 = vpop.f32.mrb[0].mxu0
    %v2186 = vadd.f32 %v2123, %v2185
    %2187 = vmatprep.mubr.bf16.mxu0 %v452
    %2188 = vmatmul.mubr.bf16.gmra.mrb[0].mxu0 %v451
    %v2189 = vpop.f32.mrb[0].mxu0
    %v2190 = vadd.f32 %v2127, %v2189
    %v2191 = vpop.f32.mrb[0].mxu0
    %v2192 = vadd.f32 %v2129, %v2191
    %v2193 = vpop.f32.mrb[0].mxu0
    %v2194 = vadd.f32 %v2131, %v2193
    %v2195 = vpop.f32.mrb[0].mxu0
    %v2196 = vadd.f32 %v2133, %v2195
    %2197 = vmatprep.mubr.bf16.mxu0 %v460
    %2198 = vmatmul.mubr.bf16.gmra.mrb[0].mxu0 %v459
    %v2199 = vpop.f32.mrb[0].mxu0
    %v2200 = vadd.f32 %v2137, %v2199
    %v2201 = vpop.f32.mrb[0].mxu0
    %v2202 = vadd.f32 %v2139, %v2201
    %v2203 = vpop.f32.mrb[0].mxu0
    %v2204 = vadd.f32 %v2141, %v2203
    %v2205 = vpop.f32.mrb[0].mxu0
    %v2206 = vadd.f32 %v2143, %v2205
    %2207 = vdwg.mxu0
    %2208 = vmatprep.subr.bf16.mxu0 %v1450
    %2209 = vmatpush1.bf16.msra.mxu0 %v1449
    %2210 = vmatprep.subr.bf16.mxu0 %v1454
    %2211 = vmatpush1.bf16.msra.mxu0 %v1453
    %2212 = vmatprep.subr.bf16.mxu0 %v1458
    %2213 = vmatpush1.bf16.msra.mxu0 %v1457
    %2214 = vmatprep.subr.bf16.mxu0 %v1462
    %2215 = vmatpush1.bf16.msra.mxu0 %v1461
    %2216 = vmatprep.subr.bf16.mxu0 %v1466
    %2217 = vmatpush1.bf16.msra.mxu0 %v1465
    %2218 = vmatprep.subr.bf16.mxu0 %v1470
    %2219 = vmatpush1.bf16.msra.mxu0 %v1469
    %2220 = vmatprep.subr.bf16.mxu0 %v1474
    %2221 = vmatpush1.bf16.msra.mxu0 %v1473
    %2222 = vmatprep.subr.bf16.mxu0 %v1478
    %2223 = vmatpush1.bf16.msra.mxu0 %v1477
    %2224 = vmatprep.subr.bf16.mxu0 %v1482
    %2225 = vmatpush1.bf16.msra.mxu0 %v1481
    %2226 = vmatprep.subr.bf16.mxu0 %v1486
    %2227 = vmatpush1.bf16.msra.mxu0 %v1485
    %2228 = vmatprep.subr.bf16.mxu0 %v1490
    %2229 = vmatpush1.bf16.msra.mxu0 %v1489
    %2230 = vmatprep.subr.bf16.mxu0 %v1494
    %2231 = vmatpush1.bf16.msra.mxu0 %v1493
    %2232 = vmatprep.subr.bf16.mxu0 %v1498
    %2233 = vmatpush1.bf16.msra.mxu0 %v1497
    %2234 = vmatprep.subr.bf16.mxu0 %v1502
    %2235 = vmatpush1.bf16.msra.mxu0 %v1501
    %2236 = vmatprep.subr.bf16.mxu0 %v1506
    %2237 = vmatpush1.bf16.msra.mxu0 %v1505
    %2238 = vmatprep.subr.bf16.mxu0 %v1510
    %2239 = vmatpush1.bf16.msra.mxu0 %v1509
    %2240 = vmatprep.mubr.bf16.mxu0 %v446
    %2241 = vmatmul.mubr.bf16.gmra.mrb[0].mxu0 %v445
    %v2242 = vpop.f32.mrb[0].mxu0
    %v2243 = vadd.f32 %v2180, %v2242
    %v2244 = vpop.f32.mrb[0].mxu0
    %v2245 = vadd.f32 %v2182, %v2244
    %v2246 = vpop.f32.mrb[0].mxu0
    %v2247 = vadd.f32 %v2184, %v2246
    %v2248 = vpop.f32.mrb[0].mxu0
    %v2249 = vadd.f32 %v2186, %v2248
    %2250 = vmatprep.mubr.bf16.mxu0 %v454
    %2251 = vmatmul.mubr.bf16.gmra.mrb[0].mxu0 %v453
    %v2252 = vpop.f32.mrb[0].mxu0
    %v2253 = vadd.f32 %v2190, %v2252
    %v2254 = vpop.f32.mrb[0].mxu0
    %v2255 = vadd.f32 %v2192, %v2254
    %v2256 = vpop.f32.mrb[0].mxu0
    %v2257 = vadd.f32 %v2194, %v2256
    %v2258 = vpop.f32.mrb[0].mxu0
    %v2259 = vadd.f32 %v2196, %v2258
    %2260 = vmatprep.mubr.bf16.mxu0 %v462
    %2261 = vmatmul.mubr.bf16.gmra.mrb[0].mxu0 %v461
    %v2262 = vpop.f32.mrb[0].mxu0
    %v2263 = vadd.f32 %v2200, %v2262
    %v2264 = vpop.f32.mrb[0].mxu0
    %v2265 = vadd.f32 %v2202, %v2264
    %v2266 = vpop.f32.mrb[0].mxu0
    %v2267 = vadd.f32 %v2204, %v2266
    %v2268 = vpop.f32.mrb[0].mxu0
    %v2269 = vadd.f32 %v2206, %v2268
    %2270 = vdwg.mxu0
    %v2271 = vmul.f32 %v1991, %v1991
    %v2272 = vmul.f32 %v1993, %v1993
    %v2273 = vmul.f32 %v2243, %v2243
    %v2274 = vmul.f32 %v2245, %v2245
    %v2275 = vmul.f32 %v1995, %v1995
    %v2276 = vmul.f32 %v1997, %v1997
    %v2277 = vmul.f32 %v2247, %v2247
    %v2278 = vmul.f32 %v2249, %v2249
    %v2279 = vmul.f32 %v2001, %v2001
    %v2280 = vmul.f32 %v2003, %v2003
    %v2281 = vmul.f32 %v2253, %v2253
    %v2282 = vmul.f32 %v2255, %v2255
    %v2283 = vmul.f32 %v2005, %v2005
    %v2284 = vmul.f32 %v2007, %v2007
    %v2285 = vmul.f32 %v2257, %v2257
    %v2286 = vmul.f32 %v2259, %v2259
    %v2287 = vmul.f32 %v2011, %v2011
    %v2288 = vmul.f32 %v2013, %v2013
    %v2289 = vmul.f32 %v2263, %v2263
    %v2290 = vmul.f32 %v2265, %v2265
    %v2291 = vmul.f32 %v2015, %v2015
    %v2292 = vmul.f32 %v2017, %v2017
    %v2293 = vmul.f32 %v2267, %v2267
    %v2294 = vmul.f32 %v2269, %v2269
    %v2295 = vadd.f32 %v2271, %v2272
    %v2296 = vadd.f32 %v2295, %v2273
    %v2297 = vadd.f32 %v2296, %v2274
    %2298 = vadd.xlane.f32.xlu0 %v2297
    %v2299 = vpop.xlane.xlu0 %2298
    %v2300 = vadd.f32 %v2275, %v2276
    %v2301 = vadd.f32 %v2300, %v2277
    %v2302 = vadd.f32 %v2301, %v2278
    %2303 = vadd.xlane.f32.xlu0 %v2302
    %v2304 = vpop.xlane.xlu0 %2303
    %v2305 = vadd.f32 %v2279, %v2280
    %v2306 = vadd.f32 %v2305, %v2281
    %v2307 = vadd.f32 %v2306, %v2282
    %2308 = vadd.xlane.f32.xlu0 %v2307
    %v2309 = vpop.xlane.xlu0 %2308
    %v2310 = vadd.f32 %v2283, %v2284
    %v2311 = vadd.f32 %v2310, %v2285
    %v2312 = vadd.f32 %v2311, %v2286
    %2313 = vadd.xlane.f32.xlu0 %v2312
    %v2314 = vpop.xlane.xlu0 %2313
    %v2315 = vadd.f32 %v2287, %v2288
    %v2316 = vadd.f32 %v2315, %v2289
    %v2317 = vadd.f32 %v2316, %v2290
    %2318 = vadd.xlane.f32.xlu0 %v2317
    %v2319 = vpop.xlane.xlu0 %2318
    %v2320 = vadd.f32 %v2291, %v2292
    %v2321 = vadd.f32 %v2320, %v2293
    %v2322 = vadd.f32 %v2321, %v2294
    %2323 = vadd.xlane.f32.xlu0 %v2322
    %v2324 = vpop.xlane.xlu0 %2323
    %v2325 = vmax.f32 %v2299, 1e-24
    %v2326 = vmax.f32 %v2304, 1e-24
    %v2327 = vmax.f32 %v2309, 1e-24
    %v2328 = vmax.f32 %v2314, 1e-24
    %v2329 = vmax.f32 %v2319, 1e-24
    %v2330 = vmax.f32 %v2324, 1e-24
    %v2331 = vrsqrt.pop %v2325
    %v2332 = vrsqrt.pop %v2326
    %v2333 = vrsqrt.pop %v2327
    %v2334 = vrsqrt.pop %v2328
    %v2335 = vrsqrt.pop %v2329
    %v2336 = vrsqrt.pop %v2330
    %v2337 = vmul.f32 %v1991, %v2331
    %v2338 = vmul.f32 %v1993, %v2331
    %v2339 = vmul.f32 %v2243, %v2331
    %v2340 = vmul.f32 %v2245, %v2331
    %v2341 = vmul.f32 %v1995, %v2332
    %v2342 = vmul.f32 %v1997, %v2332
    %v2343 = vmul.f32 %v2247, %v2332
    %v2344 = vmul.f32 %v2249, %v2332
    %v2345 = vmul.f32 %v2001, %v2333
    %v2346 = vmul.f32 %v2003, %v2333
    %v2347 = vmul.f32 %v2253, %v2333
    %v2348 = vmul.f32 %v2255, %v2333
    %v2349 = vmul.f32 %v2005, %v2334
    %v2350 = vmul.f32 %v2007, %v2334
    %v2351 = vmul.f32 %v2257, %v2334
    %v2352 = vmul.f32 %v2259, %v2334
    %v2353 = vmul.f32 %v2011, %v2335
    %v2354 = vmul.f32 %v2013, %v2335
    %v2355 = vmul.f32 %v2263, %v2335
    %v2356 = vmul.f32 %v2265, %v2335
    %v2357 = vmul.f32 %v2015, %v2336
    %v2358 = vmul.f32 %v2017, %v2336
    %v2359 = vmul.f32 %v2267, %v2336
    %v2360 = vmul.f32 %v2269, %v2336
    %v2361 = vsub.f32 %v2345, %v2337
    %v2362 = vsub.f32 %v2346, %v2338
    %v2363 = vsub.f32 %v2347, %v2339
    %v2364 = vsub.f32 %v2348, %v2340
    %v2365 = vsub.f32 %v2349, %v2341
    %v2366 = vsub.f32 %v2350, %v2342
    %v2367 = vsub.f32 %v2351, %v2343
    %v2368 = vsub.f32 %v2352, %v2344
    %v2369 = vsub.f32 %v2353, %v2337
    %v2370 = vsub.f32 %v2354, %v2338
    %v2371 = vsub.f32 %v2355, %v2339
    %v2372 = vsub.f32 %v2356, %v2340
    %v2373 = vsub.f32 %v2357, %v2341
    %v2374 = vsub.f32 %v2358, %v2342
    %v2375 = vsub.f32 %v2359, %v2343
    %v2376 = vsub.f32 %v2360, %v2344
    %v2377 = vand.u32 2147483647, %v2361
    %v2378 = vand.u32 2147483647, %v2362
    %v2379 = vand.u32 2147483647, %v2363
    %v2380 = vand.u32 2147483647, %v2364
    %v2381 = vand.u32 2147483647, %v2365
    %v2382 = vand.u32 2147483647, %v2366
    %v2383 = vand.u32 2147483647, %v2367
    %v2384 = vand.u32 2147483647, %v2368
    %v2385 = vand.u32 2147483647, %v2369
    %v2386 = vand.u32 2147483647, %v2370
    %v2387 = vand.u32 2147483647, %v2371
    %v2388 = vand.u32 2147483647, %v2372
    %v2389 = vand.u32 2147483647, %v2373
    %v2390 = vand.u32 2147483647, %v2374
    %v2391 = vand.u32 2147483647, %v2375
    %v2392 = vand.u32 2147483647, %v2376
    %v2393 = vld [vmem:[#allocation8] sm:$0xff]
    %v2394 = vld [vmem:[#allocation8 + $0x8] sm:$0xff]
    %v2395 = vld [vmem:[#allocation8 + $0x10] sm:$0xff]
    %v2396 = vld [vmem:[#allocation8 + $0x18] sm:$0xff]
    %v2397 = vld [vmem:[#allocation8 + $0x20] sm:$0xff]
    %v2398 = vld [vmem:[#allocation8 + $0x28] sm:$0xff]
    %v2399 = vld [vmem:[#allocation8 + $0x30] sm:$0xff]
    %v2400 = vld [vmem:[#allocation8 + $0x38] sm:$0xff]
    %v2401 = vld [vmem:[#allocation8 + $0x40] sm:$0xff]
    %v2402 = vld [vmem:[#allocation8 + $0x48] sm:$0xff]
    %v2403 = vld [vmem:[#allocation8 + $0x50] sm:$0xff]
    %v2404 = vld [vmem:[#allocation8 + $0x58] sm:$0xff]
    %v2405 = vld [vmem:[#allocation8 + $0x60] sm:$0xff]
    %v2406 = vld [vmem:[#allocation8 + $0x68] sm:$0xff]
    %v2407 = vld [vmem:[#allocation8 + $0x70] sm:$0xff]
    %v2408 = vld [vmem:[#allocation8 + $0x78] sm:$0xff]
    %v2409 = vld [vmem:[#allocation8 + $0x80] sm:$0xff]
    %v2410 = vld [vmem:[#allocation8 + $0x88] sm:$0xff]
    %v2411 = vld [vmem:[#allocation8 + $0x90] sm:$0xff]
    %v2412 = vld [vmem:[#allocation8 + $0x98] sm:$0xff]
    %v2413 = vld [vmem:[#allocation8 + $0xa0] sm:$0xff]
    %v2414 = vld [vmem:[#allocation8 + $0xa8] sm:$0xff]
    %v2415 = vld [vmem:[#allocation8 + $0xb0] sm:$0xff]
    %v2416 = vld [vmem:[#allocation8 + $0xb8] sm:$0xff]
    %v2417 = vld [vmem:[#allocation8 + $0xc0] sm:$0xff]
    %v2418 = vld [vmem:[#allocation8 + $0xc8] sm:$0xff]
    %v2419 = vld [vmem:[#allocation8 + $0xd0] sm:$0xff]
    %v2420 = vld [vmem:[#allocation8 + $0xd8] sm:$0xff]
    %v2421 = vld [vmem:[#allocation8 + $0xe0] sm:$0xff]
    %v2422 = vld [vmem:[#allocation8 + $0xe8] sm:$0xff]
    %v2423 = vld [vmem:[#allocation8 + $0xf0] sm:$0xff]
    %v2424 = vld [vmem:[#allocation8 + $0xf8] sm:$0xff]
    %v2425 = vld [vmem:[#allocation8 + $0x100] sm:$0xff]
    %v2426 = vld [vmem:[#allocation8 + $0x108] sm:$0xff]
    %v2427 = vld [vmem:[#allocation8 + $0x110] sm:$0xff]
    %v2428 = vld [vmem:[#allocation8 + $0x118] sm:$0xff]
    %v2429 = vld [vmem:[#allocation8 + $0x120] sm:$0xff]
    %v2430 = vld [vmem:[#allocation8 + $0x128] sm:$0xff]
    %v2431 = vld [vmem:[#allocation8 + $0x130] sm:$0xff]
    %v2432 = vld [vmem:[#allocation8 + $0x138] sm:$0xff]
    %v2433 = vld [vmem:[#allocation8 + $0x140] sm:$0xff]
    %v2434 = vld [vmem:[#allocation8 + $0x148] sm:$0xff]
    %v2435 = vld [vmem:[#allocation8 + $0x150] sm:$0xff]
    %v2436 = vld [vmem:[#allocation8 + $0x158] sm:$0xff]
    %v2437 = vld [vmem:[#allocation8 + $0x160] sm:$0xff]
    %v2438 = vld [vmem:[#allocation8 + $0x168] sm:$0xff]
    %v2439 = vld [vmem:[#allocation8 + $0x170] sm:$0xff]
    %v2440 = vld [vmem:[#allocation8 + $0x178] sm:$0xff]
    %v2441 = vld [vmem:[#allocation8 + $0x180] sm:$0xff]
    %v2442 = vld [vmem:[#allocation8 + $0x188] sm:$0xff]
    %v2443 = vld [vmem:[#allocation8 + $0x190] sm:$0xff]
    %v2444 = vld [vmem:[#allocation8 + $0x198] sm:$0xff]
    %v2445 = vld [vmem:[#allocation8 + $0x1a0] sm:$0xff]
    %v2446 = vld [vmem:[#allocation8 + $0x1a8] sm:$0xff]
    %v2447 = vld [vmem:[#allocation8 + $0x1b0] sm:$0xff]
    %v2448 = vld [vmem:[#allocation8 + $0x1b8] sm:$0xff]
    %v2449 = vld [vmem:[#allocation8 + $0x1c0] sm:$0xff]
    %v2450 = vld [vmem:[#allocation8 + $0x1c8] sm:$0xff]
    %v2451 = vld [vmem:[#allocation8 + $0x1d0] sm:$0xff]
    %v2452 = vld [vmem:[#allocation8 + $0x1d8] sm:$0xff]
    %v2453 = vld [vmem:[#allocation8 + $0x1e0] sm:$0xff]
    %v2454 = vld [vmem:[#allocation8 + $0x1e8] sm:$0xff]
    %v2455 = vld [vmem:[#allocation8 + $0x1f0] sm:$0xff]
    %v2456 = vld [vmem:[#allocation8 + $0x1f8] sm:$0xff]
    %v2457 = vld [vmem:[%s4] sm:$0x1]
    %v2459 = vlaneseq
    %v2460 = vshrl.u32 %v2459, 7
    %v2461 = vsub.s32 0, %v2460
    %v2462 = vrot.slane %v2457, %v2461
    %2464 = vmatprep.subr.mxu0 0.0
    %2465 = vmatpush1.msra.mxu0 %v2393
    %2466 = vmatprep.subr.mxu0 0.0
    %2467 = vmatpush1.msra.mxu0 %v2394
    %2468 = vmatprep.subr.mxu0 0.0
    %2469 = vmatpush1.msra.mxu0 %v2395
    %2470 = vmatprep.subr.mxu0 0.0
    %2471 = vmatpush1.msra.mxu0 %v2396
    %2472 = vmatprep.subr.mxu0 0.0
    %2473 = vmatpush1.msra.mxu0 %v2397
    %2474 = vmatprep.subr.mxu0 0.0
    %2475 = vmatpush1.msra.mxu0 %v2398
    %2476 = vmatprep.subr.mxu0 0.0
    %2477 = vmatpush1.msra.mxu0 %v2399
    %2478 = vmatprep.subr.mxu0 0.0
    %2479 = vmatpush1.msra.mxu0 %v2400
    %2480 = vmatprep.subr.mxu0 0.0
    %2481 = vmatpush1.msra.mxu0 %v2401
    %2482 = vmatprep.subr.mxu0 0.0
    %2483 = vmatpush1.msra.mxu0 %v2402
    %2484 = vmatprep.subr.mxu0 0.0
    %2485 = vmatpush1.msra.mxu0 %v2403
    %2486 = vmatprep.subr.mxu0 0.0
    %2487 = vmatpush1.msra.mxu0 %v2404
    %2488 = vmatprep.subr.mxu0 0.0
    %2489 = vmatpush1.msra.mxu0 %v2405
    %2490 = vmatprep.subr.mxu0 0.0
    %2491 = vmatpush1.msra.mxu0 %v2406
    %2492 = vmatprep.subr.mxu0 0.0
    %2493 = vmatpush1.msra.mxu0 %v2407
    %2494 = vmatprep.subr.mxu0 0.0
    %2495 = vmatpush1.msra.mxu0 %v2408
    %2496 = vmatprep.subr.mxu0 0.0
    %2497 = vmatpush1.msra.mxu0 %v2409
    %2498 = vmatprep.subr.mxu0 0.0
    %2499 = vmatpush1.msra.mxu0 %v2410
    %2500 = vmatprep.subr.mxu0 0.0
    %2501 = vmatpush1.msra.mxu0 %v2411
    %2502 = vmatprep.subr.mxu0 0.0
    %2503 = vmatpush1.msra.mxu0 %v2412
    %2504 = vmatprep.subr.mxu0 0.0
    %2505 = vmatpush1.msra.mxu0 %v2413
    %2506 = vmatprep.subr.mxu0 0.0
    %2507 = vmatpush1.msra.mxu0 %v2414
    %2508 = vmatprep.subr.mxu0 0.0
    %2509 = vmatpush1.msra.mxu0 %v2415
    %2510 = vmatprep.subr.mxu0 0.0
    %2511 = vmatpush1.msra.mxu0 %v2416
    %2512 = vmatprep.subr.mxu0 0.0
    %2513 = vmatpush1.msra.mxu0 %v2417
    %2514 = vmatprep.subr.mxu0 0.0
    %2515 = vmatpush1.msra.mxu0 %v2418
    %2516 = vmatprep.subr.mxu0 0.0
    %2517 = vmatpush1.msra.mxu0 %v2419
    %2518 = vmatprep.subr.mxu0 0.0
    %2519 = vmatpush1.msra.mxu0 %v2420
    %2520 = vmatprep.subr.mxu0 0.0
    %2521 = vmatpush1.msra.mxu0 %v2421
    %2522 = vmatprep.subr.mxu0 0.0
    %2523 = vmatpush1.msra.mxu0 %v2422
    %2524 = vmatprep.subr.mxu0 0.0
    %2525 = vmatpush1.msra.mxu0 %v2423
    %2526 = vmatprep.subr.mxu0 0.0
    %2527 = vmatpush1.msra.mxu0 %v2424
    %2528 = vmatprep.mubr.f32.mxu0 %v2378
    %2529 = vmatmul.mubr.f32.gmra.mrb[0].mxu0 %v2377
    %v2530 = vpop.f32.mrb[0].mxu0
    %v2531 = vadd.f32 %v2462, %v2530
    %v2532 = vpop.f32.mrb[0].mxu0
    %2533 = vmatprep.mubr.f32.mxu0 %v2382
    %2534 = vmatmul.mubr.f32.gmra.mrb[0].mxu0 %v2381
    %v2535 = vpop.f32.mrb[0].mxu0
    %v2536 = vadd.f32 %v2462, %v2535
    %v2537 = vpop.f32.mrb[0].mxu0
    %2538 = vmatprep.mubr.f32.mxu0 %v2386
    %2539 = vmatmul.mubr.f32.gmra.mrb[0].mxu0 %v2385
    %v2540 = vpop.f32.mrb[0].mxu0
    %v2541 = vadd.f32 %v2462, %v2540
    %v2542 = vpop.f32.mrb[0].mxu0
    %2543 = vmatprep.mubr.f32.mxu0 %v2390
    %2544 = vmatmul.mubr.f32.gmra.mrb[0].mxu0 %v2389
    %v2545 = vpop.f32.mrb[0].mxu0
    %v2546 = vadd.f32 %v2462, %v2545
    %v2547 = vpop.f32.mrb[0].mxu0
    %2548 = vdwg.mxu0
    %2549 = vmatprep.subr.mxu0 0.0
    %2550 = vmatpush1.msra.mxu0 %v2425
    %2551 = vmatprep.subr.mxu0 0.0
    %2552 = vmatpush1.msra.mxu0 %v2426
    %2553 = vmatprep.subr.mxu0 0.0
    %2554 = vmatpush1.msra.mxu0 %v2427
    %2555 = vmatprep.subr.mxu0 0.0
    %2556 = vmatpush1.msra.mxu0 %v2428
    %2557 = vmatprep.subr.mxu0 0.0
    %2558 = vmatpush1.msra.mxu0 %v2429
    %2559 = vmatprep.subr.mxu0 0.0
    %2560 = vmatpush1.msra.mxu0 %v2430
    %2561 = vmatprep.subr.mxu0 0.0
    %2562 = vmatpush1.msra.mxu0 %v2431
    %2563 = vmatprep.subr.mxu0 0.0
    %2564 = vmatpush1.msra.mxu0 %v2432
    %2565 = vmatprep.subr.mxu0 0.0
    %2566 = vmatpush1.msra.mxu0 %v2433
    %2567 = vmatprep.subr.mxu0 0.0
    %2568 = vmatpush1.msra.mxu0 %v2434
    %2569 = vmatprep.subr.mxu0 0.0
    %2570 = vmatpush1.msra.mxu0 %v2435
    %2571 = vmatprep.subr.mxu0 0.0
    %2572 = vmatpush1.msra.mxu0 %v2436
    %2573 = vmatprep.subr.mxu0 0.0
    %2574 = vmatpush1.msra.mxu0 %v2437
    %2575 = vmatprep.subr.mxu0 0.0
    %2576 = vmatpush1.msra.mxu0 %v2438
    %2577 = vmatprep.subr.mxu0 0.0
    %2578 = vmatpush1.msra.mxu0 %v2439
    %2579 = vmatprep.subr.mxu0 0.0
    %2580 = vmatpush1.msra.mxu0 %v2440
    %2581 = vmatprep.subr.mxu0 0.0
    %2582 = vmatpush1.msra.mxu0 %v2441
    %2583 = vmatprep.subr.mxu0 0.0
    %2584 = vmatpush1.msra.mxu0 %v2442
    %2585 = vmatprep.subr.mxu0 0.0
    %2586 = vmatpush1.msra.mxu0 %v2443
    %2587 = vmatprep.subr.mxu0 0.0
    %2588 = vmatpush1.msra.mxu0 %v2444
    %2589 = vmatprep.subr.mxu0 0.0
    %2590 = vmatpush1.msra.mxu0 %v2445
    %2591 = vmatprep.subr.mxu0 0.0
    %2592 = vmatpush1.msra.mxu0 %v2446
    %2593 = vmatprep.subr.mxu0 0.0
    %2594 = vmatpush1.msra.mxu0 %v2447
    %2595 = vmatprep.subr.mxu0 0.0
    %2596 = vmatpush1.msra.mxu0 %v2448
    %2597 = vmatprep.subr.mxu0 0.0
    %2598 = vmatpush1.msra.mxu0 %v2449
    %2599 = vmatprep.subr.mxu0 0.0
    %2600 = vmatpush1.msra.mxu0 %v2450
    %2601 = vmatprep.subr.mxu0 0.0
    %2602 = vmatpush1.msra.mxu0 %v2451
    %2603 = vmatprep.subr.mxu0 0.0
    %2604 = vmatpush1.msra.mxu0 %v2452
    %2605 = vmatprep.subr.mxu0 0.0
    %2606 = vmatpush1.msra.mxu0 %v2453
    %2607 = vmatprep.subr.mxu0 0.0
    %2608 = vmatpush1.msra.mxu0 %v2454
    %2609 = vmatprep.subr.mxu0 0.0
    %2610 = vmatpush1.msra.mxu0 %v2455
    %2611 = vmatprep.subr.mxu0 0.0
    %2612 = vmatpush1.msra.mxu0 %v2456
    %2613 = vmatprep.mubr.f32.mxu0 %v2380
    %2614 = vmatmul.mubr.f32.gmra.mrb[0].mxu0 %v2379
    %v2615 = vpop.f32.mrb[0].mxu0
    %v2616 = vadd.f32 %v2531, %v2615
    %v2617 = vpop.f32.mrb[0].mxu0
    %2618 = vmatprep.mubr.f32.mxu0 %v2384
    %2619 = vmatmul.mubr.f32.gmra.mrb[0].mxu0 %v2383
    %v2620 = vpop.f32.mrb[0].mxu0
    %v2621 = vadd.f32 %v2536, %v2620
    %v2622 = vpop.f32.mrb[0].mxu0
    %2623 = vmatprep.mubr.f32.mxu0 %v2388
    %2624 = vmatmul.mubr.f32.gmra.mrb[0].mxu0 %v2387
    %v2625 = vpop.f32.mrb[0].mxu0
    %v2626 = vadd.f32 %v2541, %v2625
    %v2627 = vpop.f32.mrb[0].mxu0
    %2628 = vmatprep.mubr.f32.mxu0 %v2392
    %2629 = vmatmul.mubr.f32.gmra.mrb[0].mxu0 %v2391
    %v2630 = vpop.f32.mrb[0].mxu0
    %v2631 = vadd.f32 %v2546, %v2630
    %v2632 = vpop.f32.mrb[0].mxu0
    %2633 = vdwg.mxu0
    %v2634 = vmul.f32 %v2377, %v2377
    %v2635 = vmul.f32 %v2378, %v2378
    %v2636 = vmul.f32 %v2379, %v2379
    %v2637 = vmul.f32 %v2380, %v2380
    %v2638 = vmul.f32 %v2381, %v2381
    %v2639 = vmul.f32 %v2382, %v2382
    %v2640 = vmul.f32 %v2383, %v2383
    %v2641 = vmul.f32 %v2384, %v2384
    %v2642 = vmul.f32 %v2385, %v2385
    %v2643 = vmul.f32 %v2386, %v2386
    %v2644 = vmul.f32 %v2387, %v2387
    %v2645 = vmul.f32 %v2388, %v2388
    %v2646 = vmul.f32 %v2389, %v2389
    %v2647 = vmul.f32 %v2390, %v2390
    %v2648 = vmul.f32 %v2391, %v2391
    %v2649 = vmul.f32 %v2392, %v2392
    %v2650 = vadd.f32 %v2634, %v2635
    %v2651 = vadd.f32 %v2650, %v2636
    %v2652 = vadd.f32 %v2651, %v2637
    %2653 = vadd.xlane.f32.xlu0 %v2652
    %v2654 = vpop.xlane.xlu0 %2653
    %v2655 = vadd.f32 %v2638, %v2639
    %v2656 = vadd.f32 %v2655, %v2640
    %v2657 = vadd.f32 %v2656, %v2641
    %2658 = vadd.xlane.f32.xlu0 %v2657
    %v2659 = vpop.xlane.xlu0 %2658
    %v2660 = vadd.f32 %v2642, %v2643
    %v2661 = vadd.f32 %v2660, %v2644
    %v2662 = vadd.f32 %v2661, %v2645
    %2663 = vadd.xlane.f32.xlu0 %v2662
    %v2664 = vpop.xlane.xlu0 %2663
    %v2665 = vadd.f32 %v2646, %v2647
    %v2666 = vadd.f32 %v2665, %v2648
    %v2667 = vadd.f32 %v2666, %v2649
    %2668 = vadd.xlane.f32.xlu0 %v2667
    %v2669 = vpop.xlane.xlu0 %2668
    %v2670 = vadd.f32 %v2654, %v2616
    %v2671 = vadd.f32 %v2659, %v2621
    %v2672 = vmax.f32 %v2670, 1e-12
    %v2673 = vmax.f32 %v2671, 1e-12
    %v2674 = vmin.f32 %v2672, 1e+12
    %v2675 = vmin.f32 %v2673, 1e+12
    %v2676 = vadd.f32 %v2664, %v2626
    %v2677 = vadd.f32 %v2669, %v2631
    %v2678 = vmax.f32 %v2676, 1e-12
    %v2679 = vmax.f32 %v2677, 1e-12
    %v2680 = vmin.f32 %v2678, 1e+12
    %v2681 = vmin.f32 %v2679, 1e+12
    %v2682 = vlaneseq
    %v2683 = vshrl.u32 %v2682, 7
    %v2684 = vadd.s32 %v2683, 8
    %s2685 = smul.u32 0, 16
    %v2686 = vstv %s2685
    %v2687 = vadd.s32 %v2683, %v2686
    %v2688 = vadd.s32 %v2684, %v2686
    %vm2689 = vcmp.lt.s32.totalorder %v2687, 2
    %vm2690 = vcmp.lt.s32.totalorder %v2688, 2
    %v2691 = vsel %vm2689, 1, 0
    %v2692 = vsel %vm2690, 1, 0
    %v2693 = vcvt.s32.f32 %v2691
    %v2694 = vcvt.s32.f32 %v2692
    %2697 = vrot.lane.b32.xlu0 %v2680, 127
    %v2698 = vpop.permute.xlu0 %2697
    %2699 = vrot.lane.b32.xlu0 %v2681, 127
    %v2700 = vpop.permute.xlu0 %2699
    %v2703 = vadd.f32 %v2674, %v2698
    %v2704 = vadd.f32 %v2675, %v2700
    %v2705 = vmul.f32 %v2703, %v2693
    %v2706 = vmul.f32 %v2704, %v2694
    %2709 = vrot.lane.b32.xlu0 %v2705, 126
    %v2710 = vpop.permute.xlu0 %2709
    %2711 = vrot.lane.b32.xlu0 %v2706, 126
    %v2712 = vpop.permute.xlu0 %2711
    %vm2715 = vcmask 7168
    %v2716 = vsel %vm2715, %v2710, 0.0
    %v2717 = vsel %vm2715, %v2712, 0.0
    %v2718 = vadd.f32 %v2716, %v2717
    %2719 = vadd.xlane.f32.xlu0 %v2718
    %v2720 = vpop.xlane.xlu0 %2719
    %v2721 = vrot.slane %v2720, 4
    %v2722 = vadd.f32 %v2720, %v2721
    %v2723 = vrot.slane %v2722, 2
    %v2724 = vadd.f32 %v2722, %v2723
    %v2725 = vrot.slane %v2724, 1
    %v2726 = vadd.f32 %v2724, %v2725
    %s2727 = vtos %v2726
    %s2728 = scalar_lea.smem [#allocation10], 0
    %2729 = sst [smem:[%s2728]] %s2727
    %2730 = vst [vmem:[#allocation9] sm:$0xff] %v2616
    %2731 = vst [vmem:[#allocation9 + $0x8] sm:$0xff] %v2621
    %s2732 = scalar_lea.vmem [#allocation9], 16
    %2733 = vst [vmem:[%s2732] sm:$0xff] %v2626
    %2734 = vst [vmem:[%s2732 + $0x8] sm:$0xff] %v2631
    // Predicated region
    $region34: #{tpu_custom_call.1} parent=1 // pred_check
      _
    $region35: #{tpu_custom_call.1} parent=1 // pred_check_branch
      %2736 = sbr.rel (0) target = $region37
    $region36: #{tpu_custom_call.1} parent=1 // pred_region
      %s2738 = ssub.s32 512, 512
      %2739 = vsyncadd [#allocation4], %s2738
      %s2740 = sshll.u32 [#allocation9], 4
      %s2741 = int_to_ptr.vmem [resolvable:$true] %s2740
      %2746 = dma.vmem_to_hbm [thread:$0]  %s2741, 512, %s5, [#allocation4], 128, 128, 8
    $region37: #{tpu_custom_call.1} parent=1 // pred_fallthru
      _
    // Predicated region
    $region38: #{tpu_custom_call.1} parent=1 // pred_check
      _
    $region39: #{tpu_custom_call.1} parent=1 // pred_check_branch
      %2748 = sbr.rel (0) target = $region41
    $region40: #{tpu_custom_call.1} parent=1 // pred_region
      %s2750 = ssub.s32 16, 16
      %2751 = vsyncadd [#allocation5], %s2750
      %2754 = dma.smem_to_hbm [#allocation10], 16, %s6, [#allocation5]
    $region41: #{tpu_custom_call.1} parent=1 // pred_fallthru
      _
    // Predicated region
    $region42: #{tpu_custom_call.1} parent=1 // pred_check
      _
    $region43: #{tpu_custom_call.1} parent=1 // pred_check_branch
      %2756 = sbr.rel (0) target = $region45
    $region44: #{tpu_custom_call.1} parent=1 // pred_region
      %2757 = dma.done [#allocation4], 512
    $region45: #{tpu_custom_call.1} parent=1 // pred_fallthru
      _
    // Predicated region
    $region46: #{tpu_custom_call.1} parent=1 // pred_check
      _
    $region47: #{tpu_custom_call.1} parent=1 // pred_check_branch
      %2759 = sbr.rel (0) target = $region49
    $region48: #{tpu_custom_call.1} parent=1 // pred_region
      %2760 = dma.done [#allocation5], 16
    $region49: #{tpu_custom_call.1} parent=1 // pred_fallthru
      _
    %2761 = sfence
    %2762 = vsyncpa [#allocation3], 1
    %2763 = vsyncpa [#allocation7], 1
    %2764 = vsyncpa [#allocation4], 1
    %2765 = vsyncpa [#allocation5], 1

</llo_original>
